<compile_context>
chip_gen: v7x
topology: tpu7x:2x2x1
jax: 0.10.0
libtpu: 0.0.40
codegen_flags: <defaults>
</compile_context>

<pallas_src>
import jax
import jax.numpy as jnp
import numpy as np
from jax import lax
from jax.experimental import pallas as pl
from jax.experimental.pallas import tpu as pltpu

NUM_CATEGORY = 10         # stand-in for utils.num_category
TOTAL_NUM_CATEGORY = 13   # stand-in for utils.total_num_category
C1 = 8                    # hidden channels of synthetic BoundingBoxNet
NUM_BOX = 4               # bounding-box parameters
NBOX_PAD = 8              # box head padded to 8 sublanes for the netR reduce
LANE = 128                # lane-dense padding for the box output


def _floorplan_kernel(types_ref,              # SMEM (B*num,) int32 (scalar prefetch)
                      img_ref,                # VMEM (1, HW)
                      centers_ref,            # VMEM (num, 1, HW)
                      inside_ref,             # VMEM (1, HW)
                      w1_ref, b1_ref,         # (C1, 3), (C1, 1)
                      w2_ref, b2_ref,         # (C1, LANE), (1, LANE)  padded, /HW folded
                      w3_ref, b3_ref,         # (NBOX_PAD, HW) zero-padded rows, (1, HW)
                      boxes_ref,              # VMEM out (num, 1, LANE)
                      states_ref,             # VMEM out (num, 1, HW)
                      cterm_sc):              # VMEM scratch (num, C1, HW)
    num = states_ref.shape[0]
    boff = pl.program_id(0) * num             # flat offset into the types vector

    # ---- hoisted, loop-invariant values --------------------------------------
    inside = inside_ref[...]                  # (1, HW)
    w1 = w1_ref[...]                          # (C1, 3)
    b1 = b1_ref[...]                          # (C1, 1)
    w2 = w2_ref[...]                          # (C1, LANE)
    b2 = b2_ref[...]                          # (1, LANE)
    w3 = w3_ref[...]                          # (NBOX_PAD, HW)
    b3 = b3_ref[...]                          # (1, HW)

    # normalize() folded into the state coefficient:
    #   w1c0 * ((s/(T-1) - 0.5)/0.5) = (2*w1c0/(T-1)) * s - w1c0
    w1s = w1[:, 0:1] * (2.0 / (TOTAL_NUM_CATEGORY - 1.0))     # (C1, 1)
    cbase = b1 - w1[:, 0:1]                                   # (C1, 1)
    w1c1 = w1[:, 1:2]
    w1c2 = w1[:, 2:3]
    inv_cat = 1.0 / (NUM_CATEGORY - 1.0)

    # Lane->sublane selector (identity on the first NBOX_PAD lanes), built once.
    row = lax.broadcasted_iota(jnp.int32, (NBOX_PAD, LANE), 0)
    col = lax.broadcasted_iota(jnp.int32, (NBOX_PAD, LANE), 1)
    sel = (row == col).astype(jnp.float32)                    # (NBOX_PAD, LANE)

    unroll = num if num <= 8 else 4           # full unroll is right for small num

    # ---- pre-pass: state-independent netG term per room (full ILP) -----------
    def prepass(n, carry):
        tval = types_ref[boff + n].astype(jnp.float32) * inv_cat
        cterm_sc[n] = w1c1 * centers_ref[n] + (w1c2 * tval + cbase)   # (C1, HW)
        return carry

    lax.fori_loop(0, num, prepass, 0, unroll=unroll)

    # ---- serial room recurrence; state carried in vregs ----------------------
    def body(n, state):                                       # state (1, HW)
        # netG: 1x1 conv over [norm_state, center, type] -> ReLU -> GAP -> FC -> sigmoid
        h = jnp.maximum(w1s * state + cterm_sc[n], 0.0)       # (C1, HW)
        pooled = jnp.sum(h, axis=1, keepdims=True)            # (C1, 1); 1/HW folded in w2
        box_lane = jax.nn.sigmoid(
            jnp.sum(w2 * pooled, axis=0, keepdims=True) + b2)  # (1, LANE)
        boxes_ref[n] = box_lane                                # lane-dense store

        # netR: FC(4 -> HW) + sigmoid.  Move the box values to sublanes with one
        # masked lane-reduce (instead of 4 dependent lane extracts), then one
        # sublane reduce against the zero-row-padded w3.
        box_col = jnp.sum(jnp.broadcast_to(box_lane, (NBOX_PAD, LANE)) * sel,
                          axis=1, keepdims=True)               # (NBOX_PAD, 1)
        r_mask = jax.nn.sigmoid(
            jnp.sum(box_col * w3, axis=0, keepdims=True) + b3) * inside   # (1, HW)

        # new_state = state*(1 - m) + m*type  ==  state + m*(type - state)
        rtype = types_ref[boff + n].astype(jnp.float32)
        new_state = state + r_mask * (rtype - state)
        states_ref[n] = new_state
        return new_state

    lax.fori_loop(0, num, body, img_ref[...], unroll=unroll)


def floorplan_rnn_batched(imgs, r_centers, r_types, insides, params):
    """imgs (B,H,W), r_centers (B,num,H,W), r_types (B,num), insides (B,H,W)."""
    w1, b1, w2t, b2, w3, b3 = params
    B, num = r_types.shape
    H, W = imgs.shape[-2:]
    HW = H * W

    imgs_f = imgs.reshape(B, 1, HW).astype(jnp.float32)
    centers_f = r_centers.reshape(B, num, 1, HW).astype(jnp.float32)
    insides_f = insides.reshape(B, 1, HW).astype(jnp.float32)
    types_i = r_types.reshape(B * num).astype(jnp.int32)   # flat 1-D SMEM (cheap padding)

    # Box head: pad FC(C1->4) to 128 lanes; fold 1/HW of the global-average-pool
    # into the weights so the kernel uses a plain lane sum.
    w2_pad = jnp.zeros((C1, LANE), jnp.float32).at[:, :NUM_BOX].set(w2t / float(HW))
    b2_pad = jnp.zeros((1, LANE), jnp.float32).at[:, :NUM_BOX].set(b2)
    # Renderer weights padded to 8 sublanes; padding rows MUST be exactly zero.
    w3_pad = jnp.zeros((NBOX_PAD, HW), jnp.float32).at[:NUM_BOX].set(w3)

    grid_spec = pltpu.PrefetchScalarGridSpec(
        num_scalar_prefetch=1,
        grid=(B,),                                     # independent floorplan instances
        in_specs=[
            pl.BlockSpec((None, 1, HW), lambda b, t: (b, 0, 0)),          # img
            pl.BlockSpec((None, num, 1, HW), lambda b, t: (b, 0, 0, 0)),  # centers slab
            pl.BlockSpec((None, 1, HW), lambda b, t: (b, 0, 0)),          # inside
            pl.BlockSpec((C1, 3), lambda b, t: (0, 0)),                   # w1
            pl.BlockSpec((C1, 1), lambda b, t: (0, 0)),                   # b1
            pl.BlockSpec((C1, LANE), lambda b, t: (0, 0)),                # w2 (padded,/HW)
            pl.BlockSpec((1, LANE), lambda b, t: (0, 0)),                 # b2 (padded)
            pl.BlockSpec((NBOX_PAD, HW), lambda b, t: (0, 0)),            # w3 (padded)
            pl.BlockSpec((1, HW), lambda b, t: (0, 0)),                   # b3
        ],
        out_specs=[
            pl.BlockSpec((None, num, 1, LANE), lambda b, t: (b, 0, 0, 0)),  # boxes (padded)
            pl.BlockSpec((None, num, 1, HW), lambda b, t: (b, 0, 0, 0)),    # states slab
        ],
        scratch_shapes=[pltpu.VMEM((num, C1, HW), jnp.float32)],
    )

    boxes_pad, states = pl.pallas_call(
        _floorplan_kernel,
        grid_spec=grid_spec,
        out_shape=(
            jax.ShapeDtypeStruct((B, num, 1, LANE), jnp.float32),
            jax.ShapeDtypeStruct((B, num, 1, HW), jnp.float32),
        ),
        compiler_params=pltpu.CompilerParams(
            dimension_semantics=("parallel",)),        # shard instances across TCs (v7x)
    )(types_i, imgs_f, centers_f, insides_f, w1, b1, w2_pad, b2_pad, w3_pad, b3)

    pred_rboxes = boxes_pad[:, :, 0, :NUM_BOX]          # (B, num, 4)
    pred_states = states.reshape(B, num, 1, H, W)       # (B, num, 1, H, W)
    return pred_rboxes, pred_states


def floorplan_rnn(img, r_centers, r_types, inside, params):
    """Single-instance forward matching FloorPlanRNN.forward."""
    boxes, states = floorplan_rnn_batched(img[None], r_centers[None],
                                          r_types[None], inside[None], params)
    return boxes[0], states[0]


def reference(img, r_centers, r_types, inside, params):
    """Pure-JAX reference of the same (single-instance) forward pass."""
    w1, b1, w2t, b2, w3, b3 = params
    num = r_types.shape[0]
    H, W = img.shape
    HW = H * W
    state = img.reshape(1, HW).astype(jnp.float32)
    inside_f = inside.reshape(1, HW).astype(jnp.float32)
    boxes, states = [], []
    for n in range(num):
        rtype = r_types[n].astype(jnp.float32)
        center = r_centers[n].reshape(1, HW).astype(jnp.float32)
        norm_state = (state / (TOTAL_NUM_CATEGORY - 1.0) - 0.5) / 0.5
        type_val = rtype / (NUM_CATEGORY - 1.0)
        h = jnp.maximum(w1[:, 0:1] * norm_state + w1[:, 1:2] * center
                        + w1[:, 2:3] * type_val + b1, 0.0)
        pooled = jnp.mean(h, axis=1, keepdims=True)
        logits = jnp.sum(w2t * pooled, axis=0, keepdims=True) + b2   # (1, 4)
        box = jax.nn.sigmoid(logits)
        mask = jax.nn.sigmoid(box @ w3 + b3) * inside_f
        state = state * (1.0 - mask) + mask * rtype
        boxes.append(box)
        states.append(state.reshape(1, 1, H, W))
    return jnp.concatenate(boxes, 0), jnp.concatenate(states, 0)


def init_params(key, HW):
    ks = jax.random.split(key, 6)
    w1 = jax.random.normal(ks[0], (C1, 3), jnp.float32) * 0.5
    b1 = jax.random.normal(ks[1], (C1, 1), jnp.float32) * 0.1
    w2t = jax.random.normal(ks[2], (C1, NUM_BOX), jnp.float32) * 0.5
    b2 = jax.random.normal(ks[3], (1, NUM_BOX), jnp.float32) * 0.1
    w3 = jax.random.normal(ks[4], (NUM_BOX, HW), jnp.float32) * 0.5
    b3 = jax.random.normal(ks[5], (1, HW), jnp.float32) * 0.1
    return w1, b1, w2t, b2, w3, b3


if __name__ == "__main__":
    H = W = 16
    HW = H * W
    num = 8
    B = 2

    key = jax.random.PRNGKey(0)
    k_img, k_cent, k_typ, k_ins, k_par = jax.random.split(key, 5)

    imgs = jax.random.randint(k_img, (B, H, W), 0, TOTAL_NUM_CATEGORY).astype(jnp.float32)
    r_centers = jax.random.uniform(k_cent, (B, num, H, W), jnp.float32)
    r_types = jax.random.randint(k_typ, (B, num), 1, NUM_CATEGORY).astype(jnp.float32)
    insides = (jax.random.uniform(k_ins, (B, H, W)) > 0.2).astype(jnp.float32)
    params = init_params(k_par, HW)

    # Batched path (one pallas_call, parallel grid over instances).
    boxes, states = floorplan_rnn_batched(imgs, r_centers, r_types, insides, params)
    jax.block_until_ready((boxes, states))
    for b in range(B):
        ref_boxes, ref_states = reference(imgs[b], r_centers[b], r_types[b],
                                          insides[b], params)
        assert np.allclose(np.asarray(boxes[b]), np.asarray(ref_boxes),
                           rtol=1e-3, atol=1e-3)
        assert np.allclose(np.asarray(states[b]), np.asarray(ref_states),
                           rtol=1e-3, atol=1e-3)

    # Single-instance API (matches the torch module's forward signature).
    boxes0, states0 = floorplan_rnn(imgs[0], r_centers[0], r_types[0],
                                    insides[0], params)
    jax.block_until_ready((boxes0, states0))
    ref_boxes0, ref_states0 = reference(imgs[0], r_centers[0], r_types[0],
                                        insides[0], params)
    assert np.allclose(np.asarray(boxes0), np.asarray(ref_boxes0), rtol=1e-3, atol=1e-3)
    assert np.allclose(np.asarray(states0), np.asarray(ref_states0), rtol=1e-3, atol=1e-3)

    print("KERNEL_OK")
</pallas_src>

<mosaic_0001>
module attributes {stable_mosaic.version = 11 : i64} {
  func.func @_floorplan_kernel(%arg0: i32, %arg1: memref<16xi32, #tpu.memory_space<smem>>, %arg2: memref<1x1x256xf32, #tpu.memory_space<vmem>>, %arg3: memref<1x8x1x256xf32, #tpu.memory_space<vmem>>, %arg4: memref<1x1x256xf32, #tpu.memory_space<vmem>>, %arg5: memref<8x3xf32, #tpu.memory_space<vmem>>, %arg6: memref<8x1xf32, #tpu.memory_space<vmem>>, %arg7: memref<8x128xf32, #tpu.memory_space<vmem>>, %arg8: memref<1x128xf32, #tpu.memory_space<vmem>>, %arg9: memref<8x256xf32, #tpu.memory_space<vmem>>, %arg10: memref<1x256xf32, #tpu.memory_space<vmem>>, %arg11: memref<1x8x1x128xf32, #tpu.memory_space<vmem>>, %arg12: memref<1x8x1x256xf32, #tpu.memory_space<vmem>>, %arg13: memref<8x8x256xf32, #tpu.memory_space<vmem>>) attributes {dimension_semantics = [#tpu.dimension_semantics<parallel>], iteration_bounds = array<i64: 2>, scalar_prefetch = 1 : i64, scratch_operands = 1 : i64, tpu.core_type = #tpu.core_type<tc>, window_params = [{transform_indices = @transform_0, window_bounds = array<i64: 1, 1, 256>}, {transform_indices = @transform_1, window_bounds = array<i64: 1, 8, 1, 256>}, {transform_indices = @transform_2, window_bounds = array<i64: 1, 1, 256>}, {pipeline_mode = #tpu.pipeline_mode<synchronous>, transform_indices = @transform_3, window_bounds = array<i64: 8, 3>}, {pipeline_mode = #tpu.pipeline_mode<synchronous>, transform_indices = @transform_4, window_bounds = array<i64: 8, 1>}, {pipeline_mode = #tpu.pipeline_mode<synchronous>, transform_indices = @transform_5, window_bounds = array<i64: 8, 128>}, {pipeline_mode = #tpu.pipeline_mode<synchronous>, transform_indices = @transform_6, window_bounds = array<i64: 1, 128>}, {pipeline_mode = #tpu.pipeline_mode<synchronous>, transform_indices = @transform_7, window_bounds = array<i64: 8, 256>}, {pipeline_mode = #tpu.pipeline_mode<synchronous>, transform_indices = @transform_8, window_bounds = array<i64: 1, 256>}, {transform_indices = @transform_9, window_bounds = array<i64: 1, 8, 1, 128>}, {transform_indices = @transform_10, window_bounds = array<i64: 1, 8, 1, 256>}]} {
    %c8_i32 = arith.constant 8 : i32
    %0 = arith.muli %arg0, %c8_i32 : i32
    %c0 = arith.constant 0 : index
    %c0_0 = arith.constant 0 : index
    %c0_1 = arith.constant 0 : index
    %1 = vector.load %arg4[%c0, %c0_0, %c0_1] : memref<1x1x256xf32, #tpu.memory_space<vmem>>, vector<1x1x256xf32>
    %2 = vector.shape_cast %1 : vector<1x1x256xf32> to vector<1x256xf32>
    %c0_2 = arith.constant 0 : index
    %c0_3 = arith.constant 0 : index
    %3 = vector.load %arg5[%c0_2, %c0_3] : memref<8x3xf32, #tpu.memory_space<vmem>>, vector<8x3xf32>
    %c0_4 = arith.constant 0 : index
    %c0_5 = arith.constant 0 : index
    %4 = vector.load %arg6[%c0_4, %c0_5] : memref<8x1xf32, #tpu.memory_space<vmem>>, vector<8x1xf32>
    %c0_6 = arith.constant 0 : index
    %c0_7 = arith.constant 0 : index
    %5 = vector.load %arg7[%c0_6, %c0_7] : memref<8x128xf32, #tpu.memory_space<vmem>>, vector<8x128xf32>
    %c0_8 = arith.constant 0 : index
    %c0_9 = arith.constant 0 : index
    %6 = vector.load %arg8[%c0_8, %c0_9] : memref<1x128xf32, #tpu.memory_space<vmem>>, vector<1x128xf32>
    %c0_10 = arith.constant 0 : index
    %c0_11 = arith.constant 0 : index
    %7 = vector.load %arg9[%c0_10, %c0_11] : memref<8x256xf32, #tpu.memory_space<vmem>>, vector<8x256xf32>
    %c0_12 = arith.constant 0 : index
    %c0_13 = arith.constant 0 : index
    %8 = vector.load %arg10[%c0_12, %c0_13] : memref<1x256xf32, #tpu.memory_space<vmem>>, vector<1x256xf32>
    %9 = vector.extract_strided_slice %3 {offsets = [0, 0], sizes = [8, 1], strides = [1, 1]} : vector<8x3xf32> to vector<8x1xf32>
    %cst = arith.constant 0.166666672 : f32
    %10 = vector.broadcast %cst : f32 to vector<8x1xf32>
    %11 = arith.mulf %9, %10 : vector<8x1xf32>
    %12 = vector.extract_strided_slice %3 {offsets = [0, 0], sizes = [8, 1], strides = [1, 1]} : vector<8x3xf32> to vector<8x1xf32>
    %13 = arith.subf %4, %12 : vector<8x1xf32>
    %14 = vector.extract_strided_slice %3 {offsets = [0, 1], sizes = [8, 1], strides = [1, 1]} : vector<8x3xf32> to vector<8x1xf32>
    %15 = vector.extract_strided_slice %3 {offsets = [0, 2], sizes = [8, 1], strides = [1, 1]} : vector<8x3xf32> to vector<8x1xf32>
    %16 = tpu.iota {dimensions = array<i32: 0>} : vector<8x128xi32>
    %17 = tpu.iota {dimensions = array<i32: 1>} : vector<8x128xi32>
    %18 = arith.cmpi eq, %16, %17 : vector<8x128xi32>
    %19 = arith.extui %18 : vector<8x128xi1> to vector<8x128xi32>
    %20 = arith.sitofp %19 : vector<8x128xi32> to vector<8x128xf32>
    %c0_i32 = arith.constant 0 : i32
    %21 = arith.addi %0, %c0_i32 : i32
    %22 = arith.index_cast %21 : i32 to index
    %23 = memref.load %arg1[%22] : memref<16xi32, #tpu.memory_space<smem>>
    %24 = arith.sitofp %23 : i32 to f32
    %cst_14 = arith.constant 0.111111112 : f32
    %25 = arith.mulf %24, %cst_14 : f32
    %c0_15 = arith.constant 0 : index
    %26 = arith.index_cast %c0_i32 : i32 to index
    %c0_16 = arith.constant 0 : index
    %c0_17 = arith.constant 0 : index
    %27 = vector.load %arg3[%c0_15, %26, %c0_16, %c0_17] : memref<1x8x1x256xf32, #tpu.memory_space<vmem>>, vector<1x1x1x256xf32>
    %28 = vector.shape_cast %27 : vector<1x1x1x256xf32> to vector<1x256xf32>
    %29 = vector.broadcast %14 : vector<8x1xf32> to vector<8x256xf32>
    %30 = vector.broadcast %28 : vector<1x256xf32> to vector<8x256xf32>
    %31 = arith.mulf %29, %30 : vector<8x256xf32>
    %32 = vector.broadcast %25 : f32 to vector<8x1xf32>
    %33 = arith.mulf %15, %32 : vector<8x1xf32>
    %34 = arith.addf %33, %13 : vector<8x1xf32>
    %35 = vector.broadcast %34 : vector<8x1xf32> to vector<8x256xf32>
    %36 = arith.addf %31, %35 : vector<8x256xf32>
    %37 = arith.index_cast %c0_i32 : i32 to index
    %c0_18 = arith.constant 0 : index
    %c0_19 = arith.constant 0 : index
    %38 = vector.load %arg13[%37, %c0_18, %c0_19] : memref<8x8x256xf32, #tpu.memory_space<vmem>>, vector<1x8x256xf32>
    %39 = vector.shape_cast %38 : vector<1x8x256xf32> to vector<8x256xf32>
    %40 = vector.shape_cast %36 : vector<8x256xf32> to vector<1x8x256xf32>
    tpu.vector_store %arg13[%37, %c0_18, %c0_19], %40 {strides = array<i32>} : memref<8x8x256xf32, #tpu.memory_space<vmem>>, vector<1x8x256xf32>,
    %c1_i32 = arith.constant 1 : i32
    %41 = arith.addi %0, %c1_i32 : i32
    %42 = arith.index_cast %41 : i32 to index
    %43 = memref.load %arg1[%42] : memref<16xi32, #tpu.memory_space<smem>>
    %44 = arith.sitofp %43 : i32 to f32
    %cst_20 = arith.constant 0.111111112 : f32
    %45 = arith.mulf %44, %cst_20 : f32
    %c0_21 = arith.constant 0 : index
    %46 = arith.index_cast %c1_i32 : i32 to index
    %c0_22 = arith.constant 0 : index
    %c0_23 = arith.constant 0 : index
    %47 = vector.load %arg3[%c0_21, %46, %c0_22, %c0_23] : memref<1x8x1x256xf32, #tpu.memory_space<vmem>>, vector<1x1x1x256xf32>
    %48 = vector.shape_cast %47 : vector<1x1x1x256xf32> to vector<1x256xf32>
    %49 = vector.broadcast %14 : vector<8x1xf32> to vector<8x256xf32>
    %50 = vector.broadcast %48 : vector<1x256xf32> to vector<8x256xf32>
    %51 = arith.mulf %49, %50 : vector<8x256xf32>
    %52 = vector.broadcast %45 : f32 to vector<8x1xf32>
    %53 = arith.mulf %15, %52 : vector<8x1xf32>
    %54 = arith.addf %53, %13 : vector<8x1xf32>
    %55 = vector.broadcast %54 : vector<8x1xf32> to vector<8x256xf32>
    %56 = arith.addf %51, %55 : vector<8x256xf32>
    %57 = arith.index_cast %c1_i32 : i32 to index
    %c0_24 = arith.constant 0 : index
    %c0_25 = arith.constant 0 : index
    %58 = vector.load %arg13[%57, %c0_24, %c0_25] : memref<8x8x256xf32, #tpu.memory_space<vmem>>, vector<1x8x256xf32>
    %59 = vector.shape_cast %58 : vector<1x8x256xf32> to vector<8x256xf32>
    %60 = vector.shape_cast %56 : vector<8x256xf32> to vector<1x8x256xf32>
    tpu.vector_store %arg13[%57, %c0_24, %c0_25], %60 {strides = array<i32>} : memref<8x8x256xf32, #tpu.memory_space<vmem>>, vector<1x8x256xf32>,
    %c2_i32 = arith.constant 2 : i32
    %61 = arith.addi %0, %c2_i32 : i32
    %62 = arith.index_cast %61 : i32 to index
    %63 = memref.load %arg1[%62] : memref<16xi32, #tpu.memory_space<smem>>
    %64 = arith.sitofp %63 : i32 to f32
    %cst_26 = arith.constant 0.111111112 : f32
    %65 = arith.mulf %64, %cst_26 : f32
    %c0_27 = arith.constant 0 : index
    %66 = arith.index_cast %c2_i32 : i32 to index
    %c0_28 = arith.constant 0 : index
    %c0_29 = arith.constant 0 : index
    %67 = vector.load %arg3[%c0_27, %66, %c0_28, %c0_29] : memref<1x8x1x256xf32, #tpu.memory_space<vmem>>, vector<1x1x1x256xf32>
    %68 = vector.shape_cast %67 : vector<1x1x1x256xf32> to vector<1x256xf32>
    %69 = vector.broadcast %14 : vector<8x1xf32> to vector<8x256xf32>
    %70 = vector.broadcast %68 : vector<1x256xf32> to vector<8x256xf32>
    %71 = arith.mulf %69, %70 : vector<8x256xf32>
    %72 = vector.broadcast %65 : f32 to vector<8x1xf32>
    %73 = arith.mulf %15, %72 : vector<8x1xf32>
    %74 = arith.addf %73, %13 : vector<8x1xf32>
    %75 = vector.broadcast %74 : vector<8x1xf32> to vector<8x256xf32>
    %76 = arith.addf %71, %75 : vector<8x256xf32>
    %77 = arith.index_cast %c2_i32 : i32 to index
    %c0_30 = arith.constant 0 : index
    %c0_31 = arith.constant 0 : index
    %78 = vector.load %arg13[%77, %c0_30, %c0_31] : memref<8x8x256xf32, #tpu.memory_space<vmem>>, vector<1x8x256xf32>
    %79 = vector.shape_cast %78 : vector<1x8x256xf32> to vector<8x256xf32>
    %80 = vector.shape_cast %76 : vector<8x256xf32> to vector<1x8x256xf32>
    tpu.vector_store %arg13[%77, %c0_30, %c0_31], %80 {strides = array<i32>} : memref<8x8x256xf32, #tpu.memory_space<vmem>>, vector<1x8x256xf32>,
    %c3_i32 = arith.constant 3 : i32
    %81 = arith.addi %0, %c3_i32 : i32
    %82 = arith.index_cast %81 : i32 to index
    %83 = memref.load %arg1[%82] : memref<16xi32, #tpu.memory_space<smem>>
    %84 = arith.sitofp %83 : i32 to f32
    %cst_32 = arith.constant 0.111111112 : f32
    %85 = arith.mulf %84, %cst_32 : f32
    %c0_33 = arith.constant 0 : index
    %86 = arith.index_cast %c3_i32 : i32 to index
    %c0_34 = arith.constant 0 : index
    %c0_35 = arith.constant 0 : index
    %87 = vector.load %arg3[%c0_33, %86, %c0_34, %c0_35] : memref<1x8x1x256xf32, #tpu.memory_space<vmem>>, vector<1x1x1x256xf32>
    %88 = vector.shape_cast %87 : vector<1x1x1x256xf32> to vector<1x256xf32>
    %89 = vector.broadcast %14 : vector<8x1xf32> to vector<8x256xf32>
    %90 = vector.broadcast %88 : vector<1x256xf32> to vector<8x256xf32>
    %91 = arith.mulf %89, %90 : vector<8x256xf32>
    %92 = vector.broadcast %85 : f32 to vector<8x1xf32>
    %93 = arith.mulf %15, %92 : vector<8x1xf32>
    %94 = arith.addf %93, %13 : vector<8x1xf32>
    %95 = vector.broadcast %94 : vector<8x1xf32> to vector<8x256xf32>
    %96 = arith.addf %91, %95 : vector<8x256xf32>
    %97 = arith.index_cast %c3_i32 : i32 to index
    %c0_36 = arith.constant 0 : index
    %c0_37 = arith.constant 0 : index
    %98 = vector.load %arg13[%97, %c0_36, %c0_37] : memref<8x8x256xf32, #tpu.memory_space<vmem>>, vector<1x8x256xf32>
    %99 = vector.shape_cast %98 : vector<1x8x256xf32> to vector<8x256xf32>
    %100 = vector.shape_cast %96 : vector<8x256xf32> to vector<1x8x256xf32>
    tpu.vector_store %arg13[%97, %c0_36, %c0_37], %100 {strides = array<i32>} : memref<8x8x256xf32, #tpu.memory_space<vmem>>, vector<1x8x256xf32>,
    %c4_i32 = arith.constant 4 : i32
    %101 = arith.addi %0, %c4_i32 : i32
    %102 = arith.index_cast %101 : i32 to index
    %103 = memref.load %arg1[%102] : memref<16xi32, #tpu.memory_space<smem>>
    %104 = arith.sitofp %103 : i32 to f32
    %cst_38 = arith.constant 0.111111112 : f32
    %105 = arith.mulf %104, %cst_38 : f32
    %c0_39 = arith.constant 0 : index
    %106 = arith.index_cast %c4_i32 : i32 to index
    %c0_40 = arith.constant 0 : index
    %c0_41 = arith.constant 0 : index
    %107 = vector.load %arg3[%c0_39, %106, %c0_40, %c0_41] : memref<1x8x1x256xf32, #tpu.memory_space<vmem>>, vector<1x1x1x256xf32>
    %108 = vector.shape_cast %107 : vector<1x1x1x256xf32> to vector<1x256xf32>
    %109 = vector.broadcast %14 : vector<8x1xf32> to vector<8x256xf32>
    %110 = vector.broadcast %108 : vector<1x256xf32> to vector<8x256xf32>
    %111 = arith.mulf %109, %110 : vector<8x256xf32>
    %112 = vector.broadcast %105 : f32 to vector<8x1xf32>
    %113 = arith.mulf %15, %112 : vector<8x1xf32>
    %114 = arith.addf %113, %13 : vector<8x1xf32>
    %115 = vector.broadcast %114 : vector<8x1xf32> to vector<8x256xf32>
    %116 = arith.addf %111, %115 : vector<8x256xf32>
    %117 = arith.index_cast %c4_i32 : i32 to index
    %c0_42 = arith.constant 0 : index
    %c0_43 = arith.constant 0 : index
    %118 = vector.load %arg13[%117, %c0_42, %c0_43] : memref<8x8x256xf32, #tpu.memory_space<vmem>>, vector<1x8x256xf32>
    %119 = vector.shape_cast %118 : vector<1x8x256xf32> to vector<8x256xf32>
    %120 = vector.shape_cast %116 : vector<8x256xf32> to vector<1x8x256xf32>
    tpu.vector_store %arg13[%117, %c0_42, %c0_43], %120 {strides = array<i32>} : memref<8x8x256xf32, #tpu.memory_space<vmem>>, vector<1x8x256xf32>,
    %c5_i32 = arith.constant 5 : i32
    %121 = arith.addi %0, %c5_i32 : i32
    %122 = arith.index_cast %121 : i32 to index
    %123 = memref.load %arg1[%122] : memref<16xi32, #tpu.memory_space<smem>>
    %124 = arith.sitofp %123 : i32 to f32
    %cst_44 = arith.constant 0.111111112 : f32
    %125 = arith.mulf %124, %cst_44 : f32
    %c0_45 = arith.constant 0 : index
    %126 = arith.index_cast %c5_i32 : i32 to index
    %c0_46 = arith.constant 0 : index
    %c0_47 = arith.constant 0 : index
    %127 = vector.load %arg3[%c0_45, %126, %c0_46, %c0_47] : memref<1x8x1x256xf32, #tpu.memory_space<vmem>>, vector<1x1x1x256xf32>
    %128 = vector.shape_cast %127 : vector<1x1x1x256xf32> to vector<1x256xf32>
    %129 = vector.broadcast %14 : vector<8x1xf32> to vector<8x256xf32>
    %130 = vector.broadcast %128 : vector<1x256xf32> to vector<8x256xf32>
    %131 = arith.mulf %129, %130 : vector<8x256xf32>
    %132 = vector.broadcast %125 : f32 to vector<8x1xf32>
    %133 = arith.mulf %15, %132 : vector<8x1xf32>
    %134 = arith.addf %133, %13 : vector<8x1xf32>
    %135 = vector.broadcast %134 : vector<8x1xf32> to vector<8x256xf32>
    %136 = arith.addf %131, %135 : vector<8x256xf32>
    %137 = arith.index_cast %c5_i32 : i32 to index
    %c0_48 = arith.constant 0 : index
    %c0_49 = arith.constant 0 : index
    %138 = vector.load %arg13[%137, %c0_48, %c0_49] : memref<8x8x256xf32, #tpu.memory_space<vmem>>, vector<1x8x256xf32>
    %139 = vector.shape_cast %138 : vector<1x8x256xf32> to vector<8x256xf32>
    %140 = vector.shape_cast %136 : vector<8x256xf32> to vector<1x8x256xf32>
    tpu.vector_store %arg13[%137, %c0_48, %c0_49], %140 {strides = array<i32>} : memref<8x8x256xf32, #tpu.memory_space<vmem>>, vector<1x8x256xf32>,
    %c6_i32 = arith.constant 6 : i32
    %141 = arith.addi %0, %c6_i32 : i32
    %142 = arith.index_cast %141 : i32 to index
    %143 = memref.load %arg1[%142] : memref<16xi32, #tpu.memory_space<smem>>
    %144 = arith.sitofp %143 : i32 to f32
    %cst_50 = arith.constant 0.111111112 : f32
    %145 = arith.mulf %144, %cst_50 : f32
    %c0_51 = arith.constant 0 : index
    %146 = arith.index_cast %c6_i32 : i32 to index
    %c0_52 = arith.constant 0 : index
    %c0_53 = arith.constant 0 : index
    %147 = vector.load %arg3[%c0_51, %146, %c0_52, %c0_53] : memref<1x8x1x256xf32, #tpu.memory_space<vmem>>, vector<1x1x1x256xf32>
    %148 = vector.shape_cast %147 : vector<1x1x1x256xf32> to vector<1x256xf32>
    %149 = vector.broadcast %14 : vector<8x1xf32> to vector<8x256xf32>
    %150 = vector.broadcast %148 : vector<1x256xf32> to vector<8x256xf32>
    %151 = arith.mulf %149, %150 : vector<8x256xf32>
    %152 = vector.broadcast %145 : f32 to vector<8x1xf32>
    %153 = arith.mulf %15, %152 : vector<8x1xf32>
    %154 = arith.addf %153, %13 : vector<8x1xf32>
    %155 = vector.broadcast %154 : vector<8x1xf32> to vector<8x256xf32>
    %156 = arith.addf %151, %155 : vector<8x256xf32>
    %157 = arith.index_cast %c6_i32 : i32 to index
    %c0_54 = arith.constant 0 : index
    %c0_55 = arith.constant 0 : index
    %158 = vector.load %arg13[%157, %c0_54, %c0_55] : memref<8x8x256xf32, #tpu.memory_space<vmem>>, vector<1x8x256xf32>
    %159 = vector.shape_cast %158 : vector<1x8x256xf32> to vector<8x256xf32>
    %160 = vector.shape_cast %156 : vector<8x256xf32> to vector<1x8x256xf32>
    tpu.vector_store %arg13[%157, %c0_54, %c0_55], %160 {strides = array<i32>} : memref<8x8x256xf32, #tpu.memory_space<vmem>>, vector<1x8x256xf32>,
    %c7_i32 = arith.constant 7 : i32
    %161 = arith.addi %0, %c7_i32 : i32
    %162 = arith.index_cast %161 : i32 to index
    %163 = memref.load %arg1[%162] : memref<16xi32, #tpu.memory_space<smem>>
    %164 = arith.sitofp %163 : i32 to f32
    %cst_56 = arith.constant 0.111111112 : f32
    %165 = arith.mulf %164, %cst_56 : f32
    %c0_57 = arith.constant 0 : index
    %166 = arith.index_cast %c7_i32 : i32 to index
    %c0_58 = arith.constant 0 : index
    %c0_59 = arith.constant 0 : index
    %167 = vector.load %arg3[%c0_57, %166, %c0_58, %c0_59] : memref<1x8x1x256xf32, #tpu.memory_space<vmem>>, vector<1x1x1x256xf32>
    %168 = vector.shape_cast %167 : vector<1x1x1x256xf32> to vector<1x256xf32>
    %169 = vector.broadcast %14 : vector<8x1xf32> to vector<8x256xf32>
    %170 = vector.broadcast %168 : vector<1x256xf32> to vector<8x256xf32>
    %171 = arith.mulf %169, %170 : vector<8x256xf32>
    %172 = vector.broadcast %165 : f32 to vector<8x1xf32>
    %173 = arith.mulf %15, %172 : vector<8x1xf32>
    %174 = arith.addf %173, %13 : vector<8x1xf32>
    %175 = vector.broadcast %174 : vector<8x1xf32> to vector<8x256xf32>
    %176 = arith.addf %171, %175 : vector<8x256xf32>
    %177 = arith.index_cast %c7_i32 : i32 to index
    %c0_60 = arith.constant 0 : index
    %c0_61 = arith.constant 0 : index
    %178 = vector.load %arg13[%177, %c0_60, %c0_61] : memref<8x8x256xf32, #tpu.memory_space<vmem>>, vector<1x8x256xf32>
    %179 = vector.shape_cast %178 : vector<1x8x256xf32> to vector<8x256xf32>
    %180 = vector.shape_cast %176 : vector<8x256xf32> to vector<1x8x256xf32>
    tpu.vector_store %arg13[%177, %c0_60, %c0_61], %180 {strides = array<i32>} : memref<8x8x256xf32, #tpu.memory_space<vmem>>, vector<1x8x256xf32>,
    %c8_i32_62 = arith.constant 8 : i32
    %c0_63 = arith.constant 0 : index
    %c0_64 = arith.constant 0 : index
    %c0_65 = arith.constant 0 : index
    %181 = vector.load %arg2[%c0_63, %c0_64, %c0_65] : memref<1x1x256xf32, #tpu.memory_space<vmem>>, vector<1x1x256xf32>
    %182 = vector.shape_cast %181 : vector<1x1x256xf32> to vector<1x256xf32>
    %c0_i32_66 = arith.constant 0 : i32
    %183 = vector.broadcast %11 : vector<8x1xf32> to vector<8x256xf32>
    %184 = vector.broadcast %182 : vector<1x256xf32> to vector<8x256xf32>
    %185 = arith.mulf %183, %184 : vector<8x256xf32>
    %186 = arith.index_cast %c0_i32_66 : i32 to index
    %c0_67 = arith.constant 0 : index
    %c0_68 = arith.constant 0 : index
    %187 = vector.load %arg13[%186, %c0_67, %c0_68] : memref<8x8x256xf32, #tpu.memory_space<vmem>>, vector<1x8x256xf32>
    %188 = vector.shape_cast %187 : vector<1x8x256xf32> to vector<8x256xf32>
    %189 = arith.addf %185, %188 : vector<8x256xf32>
    %cst_69 = arith.constant 0.000000e+00 : f32
    %190 = vector.broadcast %cst_69 : f32 to vector<8x256xf32>
    %191 = arith.maximumf %189, %190 : vector<8x256xf32>
    %cst_70 = arith.constant dense<0.000000e+00> : vector<8xf32>
    %192 = vector.multi_reduction <add>, %191, %cst_70 [1] : vector<8x256xf32> to vector<8xf32>
    %193 = vector.shape_cast %192 : vector<8xf32> to vector<8x1xf32>
    %194 = vector.broadcast %193 : vector<8x1xf32> to vector<8x128xf32>
    %195 = arith.mulf %5, %194 : vector<8x128xf32>
    %cst_71 = arith.constant dense<0.000000e+00> : vector<128xf32>
    %196 = vector.multi_reduction <add>, %195, %cst_71 [0] : vector<8x128xf32> to vector<128xf32>
    %197 = vector.shape_cast %196 : vector<128xf32> to vector<1x128xf32>
    %198 = arith.addf %197, %6 : vector<1x128xf32>
    %199 = arith.negf %198 : vector<1x128xf32>
    %200 = math.exp %199 : vector<1x128xf32>
    %cst_72 = arith.constant 1.000000e+00 : f32
    %201 = vector.broadcast %cst_72 : f32 to vector<1x128xf32>
    %202 = arith.addf %201, %200 : vector<1x128xf32>
    %203 = arith.divf %201, %202 : vector<1x128xf32>
    %c0_73 = arith.constant 0 : index
    %204 = arith.index_cast %c0_i32_66 : i32 to index
    %c0_74 = arith.constant 0 : index
    %c0_75 = arith.constant 0 : index
    %205 = vector.load %arg11[%c0_73, %204, %c0_74, %c0_75] : memref<1x8x1x128xf32, #tpu.memory_space<vmem>>, vector<1x1x1x128xf32>
    %206 = vector.shape_cast %205 : vector<1x1x1x128xf32> to vector<1x128xf32>
    %207 = vector.shape_cast %203 : vector<1x128xf32> to vector<1x1x1x128xf32>
    tpu.vector_store %arg11[%c0_73, %204, %c0_74, %c0_75], %207 {strides = array<i32>} : memref<1x8x1x128xf32, #tpu.memory_space<vmem>>, vector<1x1x1x128xf32>,
    %208 = vector.shape_cast %203 : vector<1x128xf32> to vector<1x128xf32>
    %209 = vector.broadcast %208 : vector<1x128xf32> to vector<8x128xf32>
    %210 = arith.mulf %209, %20 : vector<8x128xf32>
    %cst_76 = arith.constant dense<0.000000e+00> : vector<8xf32>
    %211 = vector.multi_reduction <add>, %210, %cst_76 [1] : vector<8x128xf32> to vector<8xf32>
    %212 = vector.shape_cast %211 : vector<8xf32> to vector<8x1xf32>
    %213 = vector.broadcast %212 : vector<8x1xf32> to vector<8x256xf32>
    %214 = arith.mulf %213, %7 : vector<8x256xf32>
    %cst_77 = arith.constant dense<0.000000e+00> : vector<256xf32>
    %215 = vector.multi_reduction <add>, %214, %cst_77 [0] : vector<8x256xf32> to vector<256xf32>
    %216 = vector.shape_cast %215 : vector<256xf32> to vector<1x256xf32>
    %217 = arith.addf %216, %8 : vector<1x256xf32>
    %218 = arith.negf %217 : vector<1x256xf32>
    %219 = math.exp %218 : vector<1x256xf32>
    %cst_78 = arith.constant 1.000000e+00 : f32
    %220 = vector.broadcast %cst_78 : f32 to vector<1x256xf32>
    %221 = arith.addf %220, %219 : vector<1x256xf32>
    %222 = arith.divf %220, %221 : vector<1x256xf32>
    %223 = arith.mulf %222, %2 : vector<1x256xf32>
    %224 = arith.addi %0, %c0_i32_66 : i32
    %225 = arith.index_cast %224 : i32 to index
    %226 = memref.load %arg1[%225] : memref<16xi32, #tpu.memory_space<smem>>
    %227 = arith.sitofp %226 : i32 to f32
    %228 = vector.broadcast %227 : f32 to vector<1x256xf32>
    %229 = arith.subf %228, %182 : vector<1x256xf32>
    %230 = arith.mulf %223, %229 : vector<1x256xf32>
    %231 = arith.addf %182, %230 : vector<1x256xf32>
    %c0_79 = arith.constant 0 : index
    %232 = arith.index_cast %c0_i32_66 : i32 to index
    %c0_80 = arith.constant 0 : index
    %c0_81 = arith.constant 0 : index
    %233 = vector.load %arg12[%c0_79, %232, %c0_80, %c0_81] : memref<1x8x1x256xf32, #tpu.memory_space<vmem>>, vector<1x1x1x256xf32>
    %234 = vector.shape_cast %233 : vector<1x1x1x256xf32> to vector<1x256xf32>
    %235 = vector.shape_cast %231 : vector<1x256xf32> to vector<1x1x1x256xf32>
    tpu.vector_store %arg12[%c0_79, %232, %c0_80, %c0_81], %235 {strides = array<i32>} : memref<1x8x1x256xf32, #tpu.memory_space<vmem>>, vector<1x1x1x256xf32>,
    %c1_i32_82 = arith.constant 1 : i32
    %236 = vector.broadcast %11 : vector<8x1xf32> to vector<8x256xf32>
    %237 = vector.broadcast %231 : vector<1x256xf32> to vector<8x256xf32>
    %238 = arith.mulf %236, %237 : vector<8x256xf32>
    %239 = arith.index_cast %c1_i32_82 : i32 to index
    %c0_83 = arith.constant 0 : index
    %c0_84 = arith.constant 0 : index
    %240 = vector.load %arg13[%239, %c0_83, %c0_84] : memref<8x8x256xf32, #tpu.memory_space<vmem>>, vector<1x8x256xf32>
    %241 = vector.shape_cast %240 : vector<1x8x256xf32> to vector<8x256xf32>
    %242 = arith.addf %238, %241 : vector<8x256xf32>
    %cst_85 = arith.constant 0.000000e+00 : f32
    %243 = vector.broadcast %cst_85 : f32 to vector<8x256xf32>
    %244 = arith.maximumf %242, %243 : vector<8x256xf32>
    %cst_86 = arith.constant dense<0.000000e+00> : vector<8xf32>
    %245 = vector.multi_reduction <add>, %244, %cst_86 [1] : vector<8x256xf32> to vector<8xf32>
    %246 = vector.shape_cast %245 : vector<8xf32> to vector<8x1xf32>
    %247 = vector.broadcast %246 : vector<8x1xf32> to vector<8x128xf32>
    %248 = arith.mulf %5, %247 : vector<8x128xf32>
    %cst_87 = arith.constant dense<0.000000e+00> : vector<128xf32>
    %249 = vector.multi_reduction <add>, %248, %cst_87 [0] : vector<8x128xf32> to vector<128xf32>
    %250 = vector.shape_cast %249 : vector<128xf32> to vector<1x128xf32>
    %251 = arith.addf %250, %6 : vector<1x128xf32>
    %252 = arith.negf %251 : vector<1x128xf32>
    %253 = math.exp %252 : vector<1x128xf32>
    %cst_88 = arith.constant 1.000000e+00 : f32
    %254 = vector.broadcast %cst_88 : f32 to vector<1x128xf32>
    %255 = arith.addf %254, %253 : vector<1x128xf32>
    %256 = arith.divf %254, %255 : vector<1x128xf32>
    %c0_89 = arith.constant 0 : index
    %257 = arith.index_cast %c1_i32_82 : i32 to index
    %c0_90 = arith.constant 0 : index
    %c0_91 = arith.constant 0 : index
    %258 = vector.load %arg11[%c0_89, %257, %c0_90, %c0_91] : memref<1x8x1x128xf32, #tpu.memory_space<vmem>>, vector<1x1x1x128xf32>
    %259 = vector.shape_cast %258 : vector<1x1x1x128xf32> to vector<1x128xf32>
    %260 = vector.shape_cast %256 : vector<1x128xf32> to vector<1x1x1x128xf32>
    tpu.vector_store %arg11[%c0_89, %257, %c0_90, %c0_91], %260 {strides = array<i32>} : memref<1x8x1x128xf32, #tpu.memory_space<vmem>>, vector<1x1x1x128xf32>,
    %261 = vector.shape_cast %256 : vector<1x128xf32> to vector<1x128xf32>
    %262 = vector.broadcast %261 : vector<1x128xf32> to vector<8x128xf32>
    %263 = arith.mulf %262, %20 : vector<8x128xf32>
    %cst_92 = arith.constant dense<0.000000e+00> : vector<8xf32>
    %264 = vector.multi_reduction <add>, %263, %cst_92 [1] : vector<8x128xf32> to vector<8xf32>
    %265 = vector.shape_cast %264 : vector<8xf32> to vector<8x1xf32>
    %266 = vector.broadcast %265 : vector<8x1xf32> to vector<8x256xf32>
    %267 = arith.mulf %266, %7 : vector<8x256xf32>
    %cst_93 = arith.constant dense<0.000000e+00> : vector<256xf32>
    %268 = vector.multi_reduction <add>, %267, %cst_93 [0] : vector<8x256xf32> to vector<256xf32>
    %269 = vector.shape_cast %268 : vector<256xf32> to vector<1x256xf32>
    %270 = arith.addf %269, %8 : vector<1x256xf32>
    %271 = arith.negf %270 : vector<1x256xf32>
    %272 = math.exp %271 : vector<1x256xf32>
    %cst_94 = arith.constant 1.000000e+00 : f32
    %273 = vector.broadcast %cst_94 : f32 to vector<1x256xf32>
    %274 = arith.addf %273, %272 : vector<1x256xf32>
    %275 = arith.divf %273, %274 : vector<1x256xf32>
    %276 = arith.mulf %275, %2 : vector<1x256xf32>
    %277 = arith.addi %0, %c1_i32_82 : i32
    %278 = arith.index_cast %277 : i32 to index
    %279 = memref.load %arg1[%278] : memref<16xi32, #tpu.memory_space<smem>>
    %280 = arith.sitofp %279 : i32 to f32
    %281 = vector.broadcast %280 : f32 to vector<1x256xf32>
    %282 = arith.subf %281, %231 : vector<1x256xf32>
    %283 = arith.mulf %276, %282 : vector<1x256xf32>
    %284 = arith.addf %231, %283 : vector<1x256xf32>
    %c0_95 = arith.constant 0 : index
    %285 = arith.index_cast %c1_i32_82 : i32 to index
    %c0_96 = arith.constant 0 : index
    %c0_97 = arith.constant 0 : index
    %286 = vector.load %arg12[%c0_95, %285, %c0_96, %c0_97] : memref<1x8x1x256xf32, #tpu.memory_space<vmem>>, vector<1x1x1x256xf32>
    %287 = vector.shape_cast %286 : vector<1x1x1x256xf32> to vector<1x256xf32>
    %288 = vector.shape_cast %284 : vector<1x256xf32> to vector<1x1x1x256xf32>
    tpu.vector_store %arg12[%c0_95, %285, %c0_96, %c0_97], %288 {strides = array<i32>} : memref<1x8x1x256xf32, #tpu.memory_space<vmem>>, vector<1x1x1x256xf32>,
    %c2_i32_98 = arith.constant 2 : i32
    %289 = vector.broadcast %11 : vector<8x1xf32> to vector<8x256xf32>
    %290 = vector.broadcast %284 : vector<1x256xf32> to vector<8x256xf32>
    %291 = arith.mulf %289, %290 : vector<8x256xf32>
    %292 = arith.index_cast %c2_i32_98 : i32 to index
    %c0_99 = arith.constant 0 : index
    %c0_100 = arith.constant 0 : index
    %293 = vector.load %arg13[%292, %c0_99, %c0_100] : memref<8x8x256xf32, #tpu.memory_space<vmem>>, vector<1x8x256xf32>
    %294 = vector.shape_cast %293 : vector<1x8x256xf32> to vector<8x256xf32>
    %295 = arith.addf %291, %294 : vector<8x256xf32>
    %cst_101 = arith.constant 0.000000e+00 : f32
    %296 = vector.broadcast %cst_101 : f32 to vector<8x256xf32>
    %297 = arith.maximumf %295, %296 : vector<8x256xf32>
    %cst_102 = arith.constant dense<0.000000e+00> : vector<8xf32>
    %298 = vector.multi_reduction <add>, %297, %cst_102 [1] : vector<8x256xf32> to vector<8xf32>
    %299 = vector.shape_cast %298 : vector<8xf32> to vector<8x1xf32>
    %300 = vector.broadcast %299 : vector<8x1xf32> to vector<8x128xf32>
    %301 = arith.mulf %5, %300 : vector<8x128xf32>
    %cst_103 = arith.constant dense<0.000000e+00> : vector<128xf32>
    %302 = vector.multi_reduction <add>, %301, %cst_103 [0] : vector<8x128xf32> to vector<128xf32>
    %303 = vector.shape_cast %302 : vector<128xf32> to vector<1x128xf32>
    %304 = arith.addf %303, %6 : vector<1x128xf32>
    %305 = arith.negf %304 : vector<1x128xf32>
    %306 = math.exp %305 : vector<1x128xf32>
    %cst_104 = arith.constant 1.000000e+00 : f32
    %307 = vector.broadcast %cst_104 : f32 to vector<1x128xf32>
    %308 = arith.addf %307, %306 : vector<1x128xf32>
    %309 = arith.divf %307, %308 : vector<1x128xf32>
    %c0_105 = arith.constant 0 : index
    %310 = arith.index_cast %c2_i32_98 : i32 to index
    %c0_106 = arith.constant 0 : index
    %c0_107 = arith.constant 0 : index
    %311 = vector.load %arg11[%c0_105, %310, %c0_106, %c0_107] : memref<1x8x1x128xf32, #tpu.memory_space<vmem>>, vector<1x1x1x128xf32>
    %312 = vector.shape_cast %311 : vector<1x1x1x128xf32> to vector<1x128xf32>
    %313 = vector.shape_cast %309 : vector<1x128xf32> to vector<1x1x1x128xf32>
    tpu.vector_store %arg11[%c0_105, %310, %c0_106, %c0_107], %313 {strides = array<i32>} : memref<1x8x1x128xf32, #tpu.memory_space<vmem>>, vector<1x1x1x128xf32>,
    %314 = vector.shape_cast %309 : vector<1x128xf32> to vector<1x128xf32>
    %315 = vector.broadcast %314 : vector<1x128xf32> to vector<8x128xf32>
    %316 = arith.mulf %315, %20 : vector<8x128xf32>
    %cst_108 = arith.constant dense<0.000000e+00> : vector<8xf32>
    %317 = vector.multi_reduction <add>, %316, %cst_108 [1] : vector<8x128xf32> to vector<8xf32>
    %318 = vector.shape_cast %317 : vector<8xf32> to vector<8x1xf32>
    %319 = vector.broadcast %318 : vector<8x1xf32> to vector<8x256xf32>
    %320 = arith.mulf %319, %7 : vector<8x256xf32>
    %cst_109 = arith.constant dense<0.000000e+00> : vector<256xf32>
    %321 = vector.multi_reduction <add>, %320, %cst_109 [0] : vector<8x256xf32> to vector<256xf32>
    %322 = vector.shape_cast %321 : vector<256xf32> to vector<1x256xf32>
    %323 = arith.addf %322, %8 : vector<1x256xf32>
    %324 = arith.negf %323 : vector<1x256xf32>
    %325 = math.exp %324 : vector<1x256xf32>
    %cst_110 = arith.constant 1.000000e+00 : f32
    %326 = vector.broadcast %cst_110 : f32 to vector<1x256xf32>
    %327 = arith.addf %326, %325 : vector<1x256xf32>
    %328 = arith.divf %326, %327 : vector<1x256xf32>
    %329 = arith.mulf %328, %2 : vector<1x256xf32>
    %330 = arith.addi %0, %c2_i32_98 : i32
    %331 = arith.index_cast %330 : i32 to index
    %332 = memref.load %arg1[%331] : memref<16xi32, #tpu.memory_space<smem>>
    %333 = arith.sitofp %332 : i32 to f32
    %334 = vector.broadcast %333 : f32 to vector<1x256xf32>
    %335 = arith.subf %334, %284 : vector<1x256xf32>
    %336 = arith.mulf %329, %335 : vector<1x256xf32>
    %337 = arith.addf %284, %336 : vector<1x256xf32>
    %c0_111 = arith.constant 0 : index
    %338 = arith.index_cast %c2_i32_98 : i32 to index
    %c0_112 = arith.constant 0 : index
    %c0_113 = arith.constant 0 : index
    %339 = vector.load %arg12[%c0_111, %338, %c0_112, %c0_113] : memref<1x8x1x256xf32, #tpu.memory_space<vmem>>, vector<1x1x1x256xf32>
    %340 = vector.shape_cast %339 : vector<1x1x1x256xf32> to vector<1x256xf32>
    %341 = vector.shape_cast %337 : vector<1x256xf32> to vector<1x1x1x256xf32>
    tpu.vector_store %arg12[%c0_111, %338, %c0_112, %c0_113], %341 {strides = array<i32>} : memref<1x8x1x256xf32, #tpu.memory_space<vmem>>, vector<1x1x1x256xf32>,
    %c3_i32_114 = arith.constant 3 : i32
    %342 = vector.broadcast %11 : vector<8x1xf32> to vector<8x256xf32>
    %343 = vector.broadcast %337 : vector<1x256xf32> to vector<8x256xf32>
    %344 = arith.mulf %342, %343 : vector<8x256xf32>
    %345 = arith.index_cast %c3_i32_114 : i32 to index
    %c0_115 = arith.constant 0 : index
    %c0_116 = arith.constant 0 : index
    %346 = vector.load %arg13[%345, %c0_115, %c0_116] : memref<8x8x256xf32, #tpu.memory_space<vmem>>, vector<1x8x256xf32>
    %347 = vector.shape_cast %346 : vector<1x8x256xf32> to vector<8x256xf32>
    %348 = arith.addf %344, %347 : vector<8x256xf32>
    %cst_117 = arith.constant 0.000000e+00 : f32
    %349 = vector.broadcast %cst_117 : f32 to vector<8x256xf32>
    %350 = arith.maximumf %348, %349 : vector<8x256xf32>
    %cst_118 = arith.constant dense<0.000000e+00> : vector<8xf32>
    %351 = vector.multi_reduction <add>, %350, %cst_118 [1] : vector<8x256xf32> to vector<8xf32>
    %352 = vector.shape_cast %351 : vector<8xf32> to vector<8x1xf32>
    %353 = vector.broadcast %352 : vector<8x1xf32> to vector<8x128xf32>
    %354 = arith.mulf %5, %353 : vector<8x128xf32>
    %cst_119 = arith.constant dense<0.000000e+00> : vector<128xf32>
    %355 = vector.multi_reduction <add>, %354, %cst_119 [0] : vector<8x128xf32> to vector<128xf32>
    %356 = vector.shape_cast %355 : vector<128xf32> to vector<1x128xf32>
    %357 = arith.addf %356, %6 : vector<1x128xf32>
    %358 = arith.negf %357 : vector<1x128xf32>
    %359 = math.exp %358 : vector<1x128xf32>
    %cst_120 = arith.constant 1.000000e+00 : f32
    %360 = vector.broadcast %cst_120 : f32 to vector<1x128xf32>
    %361 = arith.addf %360, %359 : vector<1x128xf32>
    %362 = arith.divf %360, %361 : vector<1x128xf32>
    %c0_121 = arith.constant 0 : index
    %363 = arith.index_cast %c3_i32_114 : i32 to index
    %c0_122 = arith.constant 0 : index
    %c0_123 = arith.constant 0 : index
    %364 = vector.load %arg11[%c0_121, %363, %c0_122, %c0_123] : memref<1x8x1x128xf32, #tpu.memory_space<vmem>>, vector<1x1x1x128xf32>
    %365 = vector.shape_cast %364 : vector<1x1x1x128xf32> to vector<1x128xf32>
    %366 = vector.shape_cast %362 : vector<1x128xf32> to vector<1x1x1x128xf32>
    tpu.vector_store %arg11[%c0_121, %363, %c0_122, %c0_123], %366 {strides = array<i32>} : memref<1x8x1x128xf32, #tpu.memory_space<vmem>>, vector<1x1x1x128xf32>,
    %367 = vector.shape_cast %362 : vector<1x128xf32> to vector<1x128xf32>
    %368 = vector.broadcast %367 : vector<1x128xf32> to vector<8x128xf32>
    %369 = arith.mulf %368, %20 : vector<8x128xf32>
    %cst_124 = arith.constant dense<0.000000e+00> : vector<8xf32>
    %370 = vector.multi_reduction <add>, %369, %cst_124 [1] : vector<8x128xf32> to vector<8xf32>
    %371 = vector.shape_cast %370 : vector<8xf32> to vector<8x1xf32>
    %372 = vector.broadcast %371 : vector<8x1xf32> to vector<8x256xf32>
    %373 = arith.mulf %372, %7 : vector<8x256xf32>
    %cst_125 = arith.constant dense<0.000000e+00> : vector<256xf32>
    %374 = vector.multi_reduction <add>, %373, %cst_125 [0] : vector<8x256xf32> to vector<256xf32>
    %375 = vector.shape_cast %374 : vector<256xf32> to vector<1x256xf32>
    %376 = arith.addf %375, %8 : vector<1x256xf32>
    %377 = arith.negf %376 : vector<1x256xf32>
    %378 = math.exp %377 : vector<1x256xf32>
    %cst_126 = arith.constant 1.000000e+00 : f32
    %379 = vector.broadcast %cst_126 : f32 to vector<1x256xf32>
    %380 = arith.addf %379, %378 : vector<1x256xf32>
    %381 = arith.divf %379, %380 : vector<1x256xf32>
    %382 = arith.mulf %381, %2 : vector<1x256xf32>
    %383 = arith.addi %0, %c3_i32_114 : i32
    %384 = arith.index_cast %383 : i32 to index
    %385 = memref.load %arg1[%384] : memref<16xi32, #tpu.memory_space<smem>>
    %386 = arith.sitofp %385 : i32 to f32
    %387 = vector.broadcast %386 : f32 to vector<1x256xf32>
    %388 = arith.subf %387, %337 : vector<1x256xf32>
    %389 = arith.mulf %382, %388 : vector<1x256xf32>
    %390 = arith.addf %337, %389 : vector<1x256xf32>
    %c0_127 = arith.constant 0 : index
    %391 = arith.index_cast %c3_i32_114 : i32 to index
    %c0_128 = arith.constant 0 : index
    %c0_129 = arith.constant 0 : index
    %392 = vector.load %arg12[%c0_127, %391, %c0_128, %c0_129] : memref<1x8x1x256xf32, #tpu.memory_space<vmem>>, vector<1x1x1x256xf32>
    %393 = vector.shape_cast %392 : vector<1x1x1x256xf32> to vector<1x256xf32>
    %394 = vector.shape_cast %390 : vector<1x256xf32> to vector<1x1x1x256xf32>
    tpu.vector_store %arg12[%c0_127, %391, %c0_128, %c0_129], %394 {strides = array<i32>} : memref<1x8x1x256xf32, #tpu.memory_space<vmem>>, vector<1x1x1x256xf32>,
    %c4_i32_130 = arith.constant 4 : i32
    %395 = vector.broadcast %11 : vector<8x1xf32> to vector<8x256xf32>
    %396 = vector.broadcast %390 : vector<1x256xf32> to vector<8x256xf32>
    %397 = arith.mulf %395, %396 : vector<8x256xf32>
    %398 = arith.index_cast %c4_i32_130 : i32 to index
    %c0_131 = arith.constant 0 : index
    %c0_132 = arith.constant 0 : index
    %399 = vector.load %arg13[%398, %c0_131, %c0_132] : memref<8x8x256xf32, #tpu.memory_space<vmem>>, vector<1x8x256xf32>
    %400 = vector.shape_cast %399 : vector<1x8x256xf32> to vector<8x256xf32>
    %401 = arith.addf %397, %400 : vector<8x256xf32>
    %cst_133 = arith.constant 0.000000e+00 : f32
    %402 = vector.broadcast %cst_133 : f32 to vector<8x256xf32>
    %403 = arith.maximumf %401, %402 : vector<8x256xf32>
    %cst_134 = arith.constant dense<0.000000e+00> : vector<8xf32>
    %404 = vector.multi_reduction <add>, %403, %cst_134 [1] : vector<8x256xf32> to vector<8xf32>
    %405 = vector.shape_cast %404 : vector<8xf32> to vector<8x1xf32>
    %406 = vector.broadcast %405 : vector<8x1xf32> to vector<8x128xf32>
    %407 = arith.mulf %5, %406 : vector<8x128xf32>
    %cst_135 = arith.constant dense<0.000000e+00> : vector<128xf32>
    %408 = vector.multi_reduction <add>, %407, %cst_135 [0] : vector<8x128xf32> to vector<128xf32>
    %409 = vector.shape_cast %408 : vector<128xf32> to vector<1x128xf32>
    %410 = arith.addf %409, %6 : vector<1x128xf32>
    %411 = arith.negf %410 : vector<1x128xf32>
    %412 = math.exp %411 : vector<1x128xf32>
    %cst_136 = arith.constant 1.000000e+00 : f32
    %413 = vector.broadcast %cst_136 : f32 to vector<1x128xf32>
    %414 = arith.addf %413, %412 : vector<1x128xf32>
    %415 = arith.divf %413, %414 : vector<1x128xf32>
    %c0_137 = arith.constant 0 : index
    %416 = arith.index_cast %c4_i32_130 : i32 to index
    %c0_138 = arith.constant 0 : index
    %c0_139 = arith.constant 0 : index
    %417 = vector.load %arg11[%c0_137, %416, %c0_138, %c0_139] : memref<1x8x1x128xf32, #tpu.memory_space<vmem>>, vector<1x1x1x128xf32>
    %418 = vector.shape_cast %417 : vector<1x1x1x128xf32> to vector<1x128xf32>
    %419 = vector.shape_cast %415 : vector<1x128xf32> to vector<1x1x1x128xf32>
    tpu.vector_store %arg11[%c0_137, %416, %c0_138, %c0_139], %419 {strides = array<i32>} : memref<1x8x1x128xf32, #tpu.memory_space<vmem>>, vector<1x1x1x128xf32>,
    %420 = vector.shape_cast %415 : vector<1x128xf32> to vector<1x128xf32>
    %421 = vector.broadcast %420 : vector<1x128xf32> to vector<8x128xf32>
    %422 = arith.mulf %421, %20 : vector<8x128xf32>
    %cst_140 = arith.constant dense<0.000000e+00> : vector<8xf32>
    %423 = vector.multi_reduction <add>, %422, %cst_140 [1] : vector<8x128xf32> to vector<8xf32>
    %424 = vector.shape_cast %423 : vector<8xf32> to vector<8x1xf32>
    %425 = vector.broadcast %424 : vector<8x1xf32> to vector<8x256xf32>
    %426 = arith.mulf %425, %7 : vector<8x256xf32>
    %cst_141 = arith.constant dense<0.000000e+00> : vector<256xf32>
    %427 = vector.multi_reduction <add>, %426, %cst_141 [0] : vector<8x256xf32> to vector<256xf32>
    %428 = vector.shape_cast %427 : vector<256xf32> to vector<1x256xf32>
    %429 = arith.addf %428, %8 : vector<1x256xf32>
    %430 = arith.negf %429 : vector<1x256xf32>
    %431 = math.exp %430 : vector<1x256xf32>
    %cst_142 = arith.constant 1.000000e+00 : f32
    %432 = vector.broadcast %cst_142 : f32 to vector<1x256xf32>
    %433 = arith.addf %432, %431 : vector<1x256xf32>
    %434 = arith.divf %432, %433 : vector<1x256xf32>
    %435 = arith.mulf %434, %2 : vector<1x256xf32>
    %436 = arith.addi %0, %c4_i32_130 : i32
    %437 = arith.index_cast %436 : i32 to index
    %438 = memref.load %arg1[%437] : memref<16xi32, #tpu.memory_space<smem>>
    %439 = arith.sitofp %438 : i32 to f32
    %440 = vector.broadcast %439 : f32 to vector<1x256xf32>
    %441 = arith.subf %440, %390 : vector<1x256xf32>
    %442 = arith.mulf %435, %441 : vector<1x256xf32>
    %443 = arith.addf %390, %442 : vector<1x256xf32>
    %c0_143 = arith.constant 0 : index
    %444 = arith.index_cast %c4_i32_130 : i32 to index
    %c0_144 = arith.constant 0 : index
    %c0_145 = arith.constant 0 : index
    %445 = vector.load %arg12[%c0_143, %444, %c0_144, %c0_145] : memref<1x8x1x256xf32, #tpu.memory_space<vmem>>, vector<1x1x1x256xf32>
    %446 = vector.shape_cast %445 : vector<1x1x1x256xf32> to vector<1x256xf32>
    %447 = vector.shape_cast %443 : vector<1x256xf32> to vector<1x1x1x256xf32>
    tpu.vector_store %arg12[%c0_143, %444, %c0_144, %c0_145], %447 {strides = array<i32>} : memref<1x8x1x256xf32, #tpu.memory_space<vmem>>, vector<1x1x1x256xf32>,
    %c5_i32_146 = arith.constant 5 : i32
    %448 = vector.broadcast %11 : vector<8x1xf32> to vector<8x256xf32>
    %449 = vector.broadcast %443 : vector<1x256xf32> to vector<8x256xf32>
    %450 = arith.mulf %448, %449 : vector<8x256xf32>
    %451 = arith.index_cast %c5_i32_146 : i32 to index
    %c0_147 = arith.constant 0 : index
    %c0_148 = arith.constant 0 : index
    %452 = vector.load %arg13[%451, %c0_147, %c0_148] : memref<8x8x256xf32, #tpu.memory_space<vmem>>, vector<1x8x256xf32>
    %453 = vector.shape_cast %452 : vector<1x8x256xf32> to vector<8x256xf32>
    %454 = arith.addf %450, %453 : vector<8x256xf32>
    %cst_149 = arith.constant 0.000000e+00 : f32
    %455 = vector.broadcast %cst_149 : f32 to vector<8x256xf32>
    %456 = arith.maximumf %454, %455 : vector<8x256xf32>
    %cst_150 = arith.constant dense<0.000000e+00> : vector<8xf32>
    %457 = vector.multi_reduction <add>, %456, %cst_150 [1] : vector<8x256xf32> to vector<8xf32>
    %458 = vector.shape_cast %457 : vector<8xf32> to vector<8x1xf32>
    %459 = vector.broadcast %458 : vector<8x1xf32> to vector<8x128xf32>
    %460 = arith.mulf %5, %459 : vector<8x128xf32>
    %cst_151 = arith.constant dense<0.000000e+00> : vector<128xf32>
    %461 = vector.multi_reduction <add>, %460, %cst_151 [0] : vector<8x128xf32> to vector<128xf32>
    %462 = vector.shape_cast %461 : vector<128xf32> to vector<1x128xf32>
    %463 = arith.addf %462, %6 : vector<1x128xf32>
    %464 = arith.negf %463 : vector<1x128xf32>
    %465 = math.exp %464 : vector<1x128xf32>
    %cst_152 = arith.constant 1.000000e+00 : f32
    %466 = vector.broadcast %cst_152 : f32 to vector<1x128xf32>
    %467 = arith.addf %466, %465 : vector<1x128xf32>
    %468 = arith.divf %466, %467 : vector<1x128xf32>
    %c0_153 = arith.constant 0 : index
    %469 = arith.index_cast %c5_i32_146 : i32 to index
    %c0_154 = arith.constant 0 : index
    %c0_155 = arith.constant 0 : index
    %470 = vector.load %arg11[%c0_153, %469, %c0_154, %c0_155] : memref<1x8x1x128xf32, #tpu.memory_space<vmem>>, vector<1x1x1x128xf32>
    %471 = vector.shape_cast %470 : vector<1x1x1x128xf32> to vector<1x128xf32>
    %472 = vector.shape_cast %468 : vector<1x128xf32> to vector<1x1x1x128xf32>
    tpu.vector_store %arg11[%c0_153, %469, %c0_154, %c0_155], %472 {strides = array<i32>} : memref<1x8x1x128xf32, #tpu.memory_space<vmem>>, vector<1x1x1x128xf32>,
    %473 = vector.shape_cast %468 : vector<1x128xf32> to vector<1x128xf32>
    %474 = vector.broadcast %473 : vector<1x128xf32> to vector<8x128xf32>
    %475 = arith.mulf %474, %20 : vector<8x128xf32>
    %cst_156 = arith.constant dense<0.000000e+00> : vector<8xf32>
    %476 = vector.multi_reduction <add>, %475, %cst_156 [1] : vector<8x128xf32> to vector<8xf32>
    %477 = vector.shape_cast %476 : vector<8xf32> to vector<8x1xf32>
    %478 = vector.broadcast %477 : vector<8x1xf32> to vector<8x256xf32>
    %479 = arith.mulf %478, %7 : vector<8x256xf32>
    %cst_157 = arith.constant dense<0.000000e+00> : vector<256xf32>
    %480 = vector.multi_reduction <add>, %479, %cst_157 [0] : vector<8x256xf32> to vector<256xf32>
    %481 = vector.shape_cast %480 : vector<256xf32> to vector<1x256xf32>
    %482 = arith.addf %481, %8 : vector<1x256xf32>
    %483 = arith.negf %482 : vector<1x256xf32>
    %484 = math.exp %483 : vector<1x256xf32>
    %cst_158 = arith.constant 1.000000e+00 : f32
    %485 = vector.broadcast %cst_158 : f32 to vector<1x256xf32>
    %486 = arith.addf %485, %484 : vector<1x256xf32>
    %487 = arith.divf %485, %486 : vector<1x256xf32>
    %488 = arith.mulf %487, %2 : vector<1x256xf32>
    %489 = arith.addi %0, %c5_i32_146 : i32
    %490 = arith.index_cast %489 : i32 to index
    %491 = memref.load %arg1[%490] : memref<16xi32, #tpu.memory_space<smem>>
    %492 = arith.sitofp %491 : i32 to f32
    %493 = vector.broadcast %492 : f32 to vector<1x256xf32>
    %494 = arith.subf %493, %443 : vector<1x256xf32>
    %495 = arith.mulf %488, %494 : vector<1x256xf32>
    %496 = arith.addf %443, %495 : vector<1x256xf32>
    %c0_159 = arith.constant 0 : index
    %497 = arith.index_cast %c5_i32_146 : i32 to index
    %c0_160 = arith.constant 0 : index
    %c0_161 = arith.constant 0 : index
    %498 = vector.load %arg12[%c0_159, %497, %c0_160, %c0_161] : memref<1x8x1x256xf32, #tpu.memory_space<vmem>>, vector<1x1x1x256xf32>
    %499 = vector.shape_cast %498 : vector<1x1x1x256xf32> to vector<1x256xf32>
    %500 = vector.shape_cast %496 : vector<1x256xf32> to vector<1x1x1x256xf32>
    tpu.vector_store %arg12[%c0_159, %497, %c0_160, %c0_161], %500 {strides = array<i32>} : memref<1x8x1x256xf32, #tpu.memory_space<vmem>>, vector<1x1x1x256xf32>,
    %c6_i32_162 = arith.constant 6 : i32
    %501 = vector.broadcast %11 : vector<8x1xf32> to vector<8x256xf32>
    %502 = vector.broadcast %496 : vector<1x256xf32> to vector<8x256xf32>
    %503 = arith.mulf %501, %502 : vector<8x256xf32>
    %504 = arith.index_cast %c6_i32_162 : i32 to index
    %c0_163 = arith.constant 0 : index
    %c0_164 = arith.constant 0 : index
    %505 = vector.load %arg13[%504, %c0_163, %c0_164] : memref<8x8x256xf32, #tpu.memory_space<vmem>>, vector<1x8x256xf32>
    %506 = vector.shape_cast %505 : vector<1x8x256xf32> to vector<8x256xf32>
    %507 = arith.addf %503, %506 : vector<8x256xf32>
    %cst_165 = arith.constant 0.000000e+00 : f32
    %508 = vector.broadcast %cst_165 : f32 to vector<8x256xf32>
    %509 = arith.maximumf %507, %508 : vector<8x256xf32>
    %cst_166 = arith.constant dense<0.000000e+00> : vector<8xf32>
    %510 = vector.multi_reduction <add>, %509, %cst_166 [1] : vector<8x256xf32> to vector<8xf32>
    %511 = vector.shape_cast %510 : vector<8xf32> to vector<8x1xf32>
    %512 = vector.broadcast %511 : vector<8x1xf32> to vector<8x128xf32>
    %513 = arith.mulf %5, %512 : vector<8x128xf32>
    %cst_167 = arith.constant dense<0.000000e+00> : vector<128xf32>
    %514 = vector.multi_reduction <add>, %513, %cst_167 [0] : vector<8x128xf32> to vector<128xf32>
    %515 = vector.shape_cast %514 : vector<128xf32> to vector<1x128xf32>
    %516 = arith.addf %515, %6 : vector<1x128xf32>
    %517 = arith.negf %516 : vector<1x128xf32>
    %518 = math.exp %517 : vector<1x128xf32>
    %cst_168 = arith.constant 1.000000e+00 : f32
    %519 = vector.broadcast %cst_168 : f32 to vector<1x128xf32>
    %520 = arith.addf %519, %518 : vector<1x128xf32>
    %521 = arith.divf %519, %520 : vector<1x128xf32>
    %c0_169 = arith.constant 0 : index
    %522 = arith.index_cast %c6_i32_162 : i32 to index
    %c0_170 = arith.constant 0 : index
    %c0_171 = arith.constant 0 : index
    %523 = vector.load %arg11[%c0_169, %522, %c0_170, %c0_171] : memref<1x8x1x128xf32, #tpu.memory_space<vmem>>, vector<1x1x1x128xf32>
    %524 = vector.shape_cast %523 : vector<1x1x1x128xf32> to vector<1x128xf32>
    %525 = vector.shape_cast %521 : vector<1x128xf32> to vector<1x1x1x128xf32>
    tpu.vector_store %arg11[%c0_169, %522, %c0_170, %c0_171], %525 {strides = array<i32>} : memref<1x8x1x128xf32, #tpu.memory_space<vmem>>, vector<1x1x1x128xf32>,
    %526 = vector.shape_cast %521 : vector<1x128xf32> to vector<1x128xf32>
    %527 = vector.broadcast %526 : vector<1x128xf32> to vector<8x128xf32>
    %528 = arith.mulf %527, %20 : vector<8x128xf32>
    %cst_172 = arith.constant dense<0.000000e+00> : vector<8xf32>
    %529 = vector.multi_reduction <add>, %528, %cst_172 [1] : vector<8x128xf32> to vector<8xf32>
    %530 = vector.shape_cast %529 : vector<8xf32> to vector<8x1xf32>
    %531 = vector.broadcast %530 : vector<8x1xf32> to vector<8x256xf32>
    %532 = arith.mulf %531, %7 : vector<8x256xf32>
    %cst_173 = arith.constant dense<0.000000e+00> : vector<256xf32>
    %533 = vector.multi_reduction <add>, %532, %cst_173 [0] : vector<8x256xf32> to vector<256xf32>
    %534 = vector.shape_cast %533 : vector<256xf32> to vector<1x256xf32>
    %535 = arith.addf %534, %8 : vector<1x256xf32>
    %536 = arith.negf %535 : vector<1x256xf32>
    %537 = math.exp %536 : vector<1x256xf32>
    %cst_174 = arith.constant 1.000000e+00 : f32
    %538 = vector.broadcast %cst_174 : f32 to vector<1x256xf32>
    %539 = arith.addf %538, %537 : vector<1x256xf32>
    %540 = arith.divf %538, %539 : vector<1x256xf32>
    %541 = arith.mulf %540, %2 : vector<1x256xf32>
    %542 = arith.addi %0, %c6_i32_162 : i32
    %543 = arith.index_cast %542 : i32 to index
    %544 = memref.load %arg1[%543] : memref<16xi32, #tpu.memory_space<smem>>
    %545 = arith.sitofp %544 : i32 to f32
    %546 = vector.broadcast %545 : f32 to vector<1x256xf32>
    %547 = arith.subf %546, %496 : vector<1x256xf32>
    %548 = arith.mulf %541, %547 : vector<1x256xf32>
    %549 = arith.addf %496, %548 : vector<1x256xf32>
    %c0_175 = arith.constant 0 : index
    %550 = arith.index_cast %c6_i32_162 : i32 to index
    %c0_176 = arith.constant 0 : index
    %c0_177 = arith.constant 0 : index
    %551 = vector.load %arg12[%c0_175, %550, %c0_176, %c0_177] : memref<1x8x1x256xf32, #tpu.memory_space<vmem>>, vector<1x1x1x256xf32>
    %552 = vector.shape_cast %551 : vector<1x1x1x256xf32> to vector<1x256xf32>
    %553 = vector.shape_cast %549 : vector<1x256xf32> to vector<1x1x1x256xf32>
    tpu.vector_store %arg12[%c0_175, %550, %c0_176, %c0_177], %553 {strides = array<i32>} : memref<1x8x1x256xf32, #tpu.memory_space<vmem>>, vector<1x1x1x256xf32>,
    %c7_i32_178 = arith.constant 7 : i32
    %554 = vector.broadcast %11 : vector<8x1xf32> to vector<8x256xf32>
    %555 = vector.broadcast %549 : vector<1x256xf32> to vector<8x256xf32>
    %556 = arith.mulf %554, %555 : vector<8x256xf32>
    %557 = arith.index_cast %c7_i32_178 : i32 to index
    %c0_179 = arith.constant 0 : index
    %c0_180 = arith.constant 0 : index
    %558 = vector.load %arg13[%557, %c0_179, %c0_180] : memref<8x8x256xf32, #tpu.memory_space<vmem>>, vector<1x8x256xf32>
    %559 = vector.shape_cast %558 : vector<1x8x256xf32> to vector<8x256xf32>
    %560 = arith.addf %556, %559 : vector<8x256xf32>
    %cst_181 = arith.constant 0.000000e+00 : f32
    %561 = vector.broadcast %cst_181 : f32 to vector<8x256xf32>
    %562 = arith.maximumf %560, %561 : vector<8x256xf32>
    %cst_182 = arith.constant dense<0.000000e+00> : vector<8xf32>
    %563 = vector.multi_reduction <add>, %562, %cst_182 [1] : vector<8x256xf32> to vector<8xf32>
    %564 = vector.shape_cast %563 : vector<8xf32> to vector<8x1xf32>
    %565 = vector.broadcast %564 : vector<8x1xf32> to vector<8x128xf32>
    %566 = arith.mulf %5, %565 : vector<8x128xf32>
    %cst_183 = arith.constant dense<0.000000e+00> : vector<128xf32>
    %567 = vector.multi_reduction <add>, %566, %cst_183 [0] : vector<8x128xf32> to vector<128xf32>
    %568 = vector.shape_cast %567 : vector<128xf32> to vector<1x128xf32>
    %569 = arith.addf %568, %6 : vector<1x128xf32>
    %570 = arith.negf %569 : vector<1x128xf32>
    %571 = math.exp %570 : vector<1x128xf32>
    %cst_184 = arith.constant 1.000000e+00 : f32
    %572 = vector.broadcast %cst_184 : f32 to vector<1x128xf32>
    %573 = arith.addf %572, %571 : vector<1x128xf32>
    %574 = arith.divf %572, %573 : vector<1x128xf32>
    %c0_185 = arith.constant 0 : index
    %575 = arith.index_cast %c7_i32_178 : i32 to index
    %c0_186 = arith.constant 0 : index
    %c0_187 = arith.constant 0 : index
    %576 = vector.load %arg11[%c0_185, %575, %c0_186, %c0_187] : memref<1x8x1x128xf32, #tpu.memory_space<vmem>>, vector<1x1x1x128xf32>
    %577 = vector.shape_cast %576 : vector<1x1x1x128xf32> to vector<1x128xf32>
    %578 = vector.shape_cast %574 : vector<1x128xf32> to vector<1x1x1x128xf32>
    tpu.vector_store %arg11[%c0_185, %575, %c0_186, %c0_187], %578 {strides = array<i32>} : memref<1x8x1x128xf32, #tpu.memory_space<vmem>>, vector<1x1x1x128xf32>,
    %579 = vector.shape_cast %574 : vector<1x128xf32> to vector<1x128xf32>
    %580 = vector.broadcast %579 : vector<1x128xf32> to vector<8x128xf32>
    %581 = arith.mulf %580, %20 : vector<8x128xf32>
    %cst_188 = arith.constant dense<0.000000e+00> : vector<8xf32>
    %582 = vector.multi_reduction <add>, %581, %cst_188 [1] : vector<8x128xf32> to vector<8xf32>
    %583 = vector.shape_cast %582 : vector<8xf32> to vector<8x1xf32>
    %584 = vector.broadcast %583 : vector<8x1xf32> to vector<8x256xf32>
    %585 = arith.mulf %584, %7 : vector<8x256xf32>
    %cst_189 = arith.constant dense<0.000000e+00> : vector<256xf32>
    %586 = vector.multi_reduction <add>, %585, %cst_189 [0] : vector<8x256xf32> to vector<256xf32>
    %587 = vector.shape_cast %586 : vector<256xf32> to vector<1x256xf32>
    %588 = arith.addf %587, %8 : vector<1x256xf32>
    %589 = arith.negf %588 : vector<1x256xf32>
    %590 = math.exp %589 : vector<1x256xf32>
    %cst_190 = arith.constant 1.000000e+00 : f32
    %591 = vector.broadcast %cst_190 : f32 to vector<1x256xf32>
    %592 = arith.addf %591, %590 : vector<1x256xf32>
    %593 = arith.divf %591, %592 : vector<1x256xf32>
    %594 = arith.mulf %593, %2 : vector<1x256xf32>
    %595 = arith.addi %0, %c7_i32_178 : i32
    %596 = arith.index_cast %595 : i32 to index
    %597 = memref.load %arg1[%596] : memref<16xi32, #tpu.memory_space<smem>>
    %598 = arith.sitofp %597 : i32 to f32
    %599 = vector.broadcast %598 : f32 to vector<1x256xf32>
    %600 = arith.subf %599, %549 : vector<1x256xf32>
    %601 = arith.mulf %594, %600 : vector<1x256xf32>
    %602 = arith.addf %549, %601 : vector<1x256xf32>
    %c0_191 = arith.constant 0 : index
    %603 = arith.index_cast %c7_i32_178 : i32 to index
    %c0_192 = arith.constant 0 : index
    %c0_193 = arith.constant 0 : index
    %604 = vector.load %arg12[%c0_191, %603, %c0_192, %c0_193] : memref<1x8x1x256xf32, #tpu.memory_space<vmem>>, vector<1x1x1x256xf32>
    %605 = vector.shape_cast %604 : vector<1x1x1x256xf32> to vector<1x256xf32>
    %606 = vector.shape_cast %602 : vector<1x256xf32> to vector<1x1x1x256xf32>
    tpu.vector_store %arg12[%c0_191, %603, %c0_192, %c0_193], %606 {strides = array<i32>} : memref<1x8x1x256xf32, #tpu.memory_space<vmem>>, vector<1x1x1x256xf32>,
    %c8_i32_194 = arith.constant 8 : i32
    return
  }
  func.func @transform_0(%arg0: i32, %arg1: memref<16xi32, #tpu.memory_space<smem>>) -> (i32, i32, i32) {
    %c0_i32 = arith.constant 0 : i32
    %c0_i32_0 = arith.constant 0 : i32
    %c0_i32_1 = arith.constant 0 : i32
    return %arg0, %c0_i32, %c0_i32_0 : i32, i32, i32
  }
  func.func @transform_1(%arg0: i32, %arg1: memref<16xi32, #tpu.memory_space<smem>>) -> (i32, i32, i32, i32) {
    %c0_i32 = arith.constant 0 : i32
    %c0_i32_0 = arith.constant 0 : i32
    %c0_i32_1 = arith.constant 0 : i32
    %c0_i32_2 = arith.constant 0 : i32
    return %arg0, %c0_i32, %c0_i32_0, %c0_i32_1 : i32, i32, i32, i32
  }
  func.func @transform_2(%arg0: i32, %arg1: memref<16xi32, #tpu.memory_space<smem>>) -> (i32, i32, i32) {
    %c0_i32 = arith.constant 0 : i32
    %c0_i32_0 = arith.constant 0 : i32
    %c0_i32_1 = arith.constant 0 : i32
    return %arg0, %c0_i32, %c0_i32_0 : i32, i32, i32
  }
  func.func @transform_3(%arg0: i32, %arg1: memref<16xi32, #tpu.memory_space<smem>>) -> (i32, i32) {
    %c0_i32 = arith.constant 0 : i32
    %c0_i32_0 = arith.constant 0 : i32
    %c0_i32_1 = arith.constant 0 : i32
    return %c0_i32, %c0_i32_0 : i32, i32
  }
  func.func @transform_4(%arg0: i32, %arg1: memref<16xi32, #tpu.memory_space<smem>>) -> (i32, i32) {
    %c0_i32 = arith.constant 0 : i32
    %c0_i32_0 = arith.constant 0 : i32
    %c0_i32_1 = arith.constant 0 : i32
    return %c0_i32, %c0_i32_0 : i32, i32
  }
  func.func @transform_5(%arg0: i32, %arg1: memref<16xi32, #tpu.memory_space<smem>>) -> (i32, i32) {
    %c0_i32 = arith.constant 0 : i32
    %c0_i32_0 = arith.constant 0 : i32
    %c0_i32_1 = arith.constant 0 : i32
    return %c0_i32, %c0_i32_0 : i32, i32
  }
  func.func @transform_6(%arg0: i32, %arg1: memref<16xi32, #tpu.memory_space<smem>>) -> (i32, i32) {
    %c0_i32 = arith.constant 0 : i32
    %c0_i32_0 = arith.constant 0 : i32
    %c0_i32_1 = arith.constant 0 : i32
    return %c0_i32, %c0_i32_0 : i32, i32
  }
  func.func @transform_7(%arg0: i32, %arg1: memref<16xi32, #tpu.memory_space<smem>>) -> (i32, i32) {
    %c0_i32 = arith.constant 0 : i32
    %c0_i32_0 = arith.constant 0 : i32
    %c0_i32_1 = arith.constant 0 : i32
    return %c0_i32, %c0_i32_0 : i32, i32
  }
  func.func @transform_8(%arg0: i32, %arg1: memref<16xi32, #tpu.memory_space<smem>>) -> (i32, i32) {
    %c0_i32 = arith.constant 0 : i32
    %c0_i32_0 = arith.constant 0 : i32
    %c0_i32_1 = arith.constant 0 : i32
    return %c0_i32, %c0_i32_0 : i32, i32
  }
  func.func @transform_9(%arg0: i32, %arg1: memref<16xi32, #tpu.memory_space<smem>>) -> (i32, i32, i32, i32) {
    %c0_i32 = arith.constant 0 : i32
    %c0_i32_0 = arith.constant 0 : i32
    %c0_i32_1 = arith.constant 0 : i32
    %c0_i32_2 = arith.constant 0 : i32
    return %arg0, %c0_i32, %c0_i32_0, %c0_i32_1 : i32, i32, i32, i32
  }
  func.func @transform_10(%arg0: i32, %arg1: memref<16xi32, #tpu.memory_space<smem>>) -> (i32, i32, i32, i32) {
    %c0_i32 = arith.constant 0 : i32
    %c0_i32_0 = arith.constant 0 : i32
    %c0_i32_1 = arith.constant 0 : i32
    %c0_i32_2 = arith.constant 0 : i32
    return %arg0, %c0_i32, %c0_i32_0, %c0_i32_1 : i32, i32, i32, i32
  }
}

</mosaic_0001>

<llo_original>
// kernel: tpu_custom_call.1
$region0: #{tpu_custom_call.1}
  #allocation0 [shape = 'u32[]', space=smem, size = 0x4, offset = 0x4, fixed_abs, tag = 'smem constant byte address 0x4 - core index']
  #allocation1 [shape = 'u32[144,128]{1,0:T(1,128)}', space=vmem, size = 0x12000, scoped, tag = 'internal scratch']
  #allocation2 [shape = 'f32[8,8,256]{2,1,0:T(8,128)}', space=vmem, size = 0x10000, scoped, tag = 'scratch operand']
  #allocation3 [shape = 's32[1]{0}', space=sflag, size = 0x4, scoped, tag = 'scoped memory for tpu_custom_call.1']
  #allocation4 [shape = 'u8[512]{0}', space=smem, size = 0x200, scoped, tag = 'prefetched SMEM operand 0']
  %s0 = inlined_call_operand.hbm [shape: s32[16], index: 0, kind: input, shape index: {}]
  %s1 = inlined_call_operand.vmem [shape: f32[2,1,256], index: 1, kind: input, shape index: {}]
  %s2 = inlined_call_operand.hbm [shape: f32[2,8,1,256], index: 2, kind: input, shape index: {}]
  %s3 = inlined_call_operand.vmem [shape: f32[2,1,256], index: 3, kind: input, shape index: {}]
  %s4 = inlined_call_operand.vmem [shape: f32[8,3], index: 4, kind: input, shape index: {}]
  %s5 = inlined_call_operand.vmem [shape: f32[8,1], index: 5, kind: input, shape index: {}]
  %s6 = inlined_call_operand.vmem [shape: f32[8,128], index: 6, kind: input, shape index: {}]
  %s7 = inlined_call_operand.vmem [shape: f32[1,128], index: 7, kind: input, shape index: {}]
  %s8 = inlined_call_operand.vmem [shape: f32[8,256], index: 8, kind: input, shape index: {}]
  %s9 = inlined_call_operand.vmem [shape: f32[1,256], index: 9, kind: input, shape index: {}]
  %s10 = inlined_call_operand.hbm [shape: f32[2,8,1,128], index: 10, kind: output, shape index: {0}]
  %s11 = inlined_call_operand.hbm [shape: f32[2,8,1,256], index: 11, kind: output, shape index: {1}]
  %12 = xla_tuple %s10, %s11
  %s13 = sld [smem:[#allocation0]]
  $region81: #{tpu_custom_call.1} parent=0
    _
  %s15 = ssub.s32 1, %s13
  %s16 = scalar_select 0, %s15, %s13
  %18 = dma.hbm_to_smem %s0, 16, [#allocation4], [#allocation3]
  %19 = dma.done [#allocation3], 16
  %20 = sfence
  $region1: #{tpu_custom_call.1} parent=0
    #allocation5 [shape = 'u8[16384]{0}', space=vmem, size = 0x4000, scoped, tag = 'input window, operand 2']
    #allocation6 [shape = 's32[2]{0}', space=sflag, size = 0x8, scoped, tag = 'scoped memory for tpu_custom_call.1']
    #allocation7 [shape = 's32[2]{0}', space=sflag, size = 0x8, scoped, tag = 'scoped memory for tpu_custom_call.1']
    #allocation8 [shape = 'u8[8192]{0}', space=vmem, size = 0x2000, scoped, tag = 'output window, operand 0']
    #allocation9 [shape = 'u8[16384]{0}', space=vmem, size = 0x4000, scoped, tag = 'output window, operand 1']
    #allocation10 [shape = 's32[2]{0}', space=sflag, size = 0x8, scoped, tag = 'scoped memory for tpu_custom_call.1']
    %21 = vsyncpa [#allocation6], 0
    %s22 = scalar_lea.sflag [#allocation6], 1
    %23 = vsyncpa %s22, 0
    %24 = vsyncpa [#allocation7], 0
    %s25 = scalar_lea.sflag [#allocation7], 1
    %26 = vsyncpa %s25, 0
    %27 = vsyncpa [#allocation10], 0
    %s28 = scalar_lea.sflag [#allocation10], 1
    %29 = vsyncpa %s28, 0
    loop: start=0, step=1, limit=4
    $region2: #{tpu_custom_call.1} parent=1 // loop_pre_header
      _
    $region3: #{tpu_custom_call.1} parent=1 // loop_header
      %s31 = sphi 0, %s35
      %p32 = scmp.ge.s32.totalorder %s31, 4
      %s41 = sphi 0, %s43
      %s44 = sphi 0, %s41
      %s45 = sphi 0, %s44
      %s61 = sphi 0, %s45
      %s67 = sphi 0, %s69
      %s70 = sphi 0, %s67
      %s71 = sphi 0, %s70
      %s87 = sphi 0, %s71
      %s93 = sphi 0, %s95
      %s96 = sphi 0, %s93
      %s97 = sphi 0, %s96
      %s113 = sphi 0, %s97
      %s117 = sphi 0, %s117
      %s119 = sphi 0, %s117
      %s120 = sphi 0, %s119
      %s134 = sphi 0, %s120
      %s138 = sphi 0, %s138
      %s140 = sphi 0, %s138
      %s141 = sphi 0, %s140
      %s155 = sphi 0, %s141
      %s159 = sphi 0, %s159
      %s161 = sphi 0, %s159
      %s162 = sphi 0, %s161
      %s176 = sphi 0, %s162
      %s180 = sphi 0, %s180
      %s182 = sphi 0, %s180
      %s183 = sphi 0, %s182
      %s197 = sphi 0, %s183
      %s201 = sphi 0, %s201
      %s203 = sphi 0, %s201
      %s204 = sphi 0, %s203
      %s218 = sphi 0, %s204
      %s222 = sphi 0, %s222
      %s224 = sphi 0, %s222
      %s225 = sphi 0, %s224
      %s239 = sphi 0, %s225
      %s245 = sphi 0, %s247
      %s248 = sphi 0, %s245
      %s249 = sphi 0, %s248
      %s265 = sphi 0, %s249
      %s271 = sphi 0, %s273
      %s274 = sphi 0, %s271
      %s275 = sphi 0, %s274
      %s291 = sphi 0, %s275
    $region4: #{tpu_custom_call.1} parent=1 // loop_header_branch
      %34 = sbr.rel (%p32) target = $region8
    $region5: #{tpu_custom_call.1} parent=1 // loop_body
      %s36 = ssub.s32 %s31, 1
      %s37 = ssub.s32 %s31, 2
      %s38 = sadd.s32 %s31, 1
      %s39 = ssub.s32 %s31, %s38
      %p40 = scmp.eq.s32.totalorder %s39, 0
      %s42 = sadd.s32 %s41, 1
      %s43 = scalar_select %p40, %s41, %s42
      %p46 = pneg %p40
      %p47 = scmp.eq.s32.totalorder %s31, 1
      %p48 = por %p46, %p47
      %p49 = scmp.ne.s32.totalorder %s41, %s44
      %p50 = scmp.eq.s32.totalorder %s31, 0
      %p51 = por %p49, %p50
      %p52 = scmp.ne.s32.totalorder %s41, %s44
      %p53 = scmp.eq.s32.totalorder %s36, 1
      %p54 = por %p52, %p53
      %p55 = scmp.ne.s32.totalorder %s44, %s45
      %p56 = scmp.eq.s32.totalorder %s36, 0
      %p57 = por %p55, %p56
      %p58 = scmp.ne.s32.totalorder %s44, %s45
      %p59 = scmp.eq.s32.totalorder %s37, 1
      %p60 = por %p58, %p59
      %p62 = scmp.ne.s32.totalorder %s45, %s61
      %p63 = scmp.eq.s32.totalorder %s37, 0
      %p64 = por %p62, %p63
      %s65 = ssub.s32 %s31, %s38
      %p66 = scmp.eq.s32.totalorder %s65, 0
      %s68 = sadd.s32 %s67, 1
      %s69 = scalar_select %p66, %s67, %s68
      %p72 = pneg %p66
      %p73 = scmp.eq.s32.totalorder %s31, 1
      %p74 = por %p72, %p73
      %p75 = scmp.ne.s32.totalorder %s67, %s70
      %p76 = scmp.eq.s32.totalorder %s31, 0
      %p77 = por %p75, %p76
      %p78 = scmp.ne.s32.totalorder %s67, %s70
      %p79 = scmp.eq.s32.totalorder %s36, 1
      %p80 = por %p78, %p79
      %p81 = scmp.ne.s32.totalorder %s70, %s71
      %p82 = scmp.eq.s32.totalorder %s36, 0
      %p83 = por %p81, %p82
      %p84 = scmp.ne.s32.totalorder %s70, %s71
      %p85 = scmp.eq.s32.totalorder %s37, 1
      %p86 = por %p84, %p85
      %p88 = scmp.ne.s32.totalorder %s71, %s87
      %p89 = scmp.eq.s32.totalorder %s37, 0
      %p90 = por %p88, %p89
      %s91 = ssub.s32 %s31, %s38
      %p92 = scmp.eq.s32.totalorder %s91, 0
      %s94 = sadd.s32 %s93, 1
      %s95 = scalar_select %p92, %s93, %s94
      %p98 = pneg %p92
      %p99 = scmp.eq.s32.totalorder %s31, 1
      %p100 = por %p98, %p99
      %p101 = scmp.ne.s32.totalorder %s93, %s96
      %p102 = scmp.eq.s32.totalorder %s31, 0
      %p103 = por %p101, %p102
      %p104 = scmp.ne.s32.totalorder %s93, %s96
      %p105 = scmp.eq.s32.totalorder %s36, 1
      %p106 = por %p104, %p105
      %p107 = scmp.ne.s32.totalorder %s96, %s97
      %p108 = scmp.eq.s32.totalorder %s36, 0
      %p109 = por %p107, %p108
      %p110 = scmp.ne.s32.totalorder %s96, %s97
      %p111 = scmp.eq.s32.totalorder %s37, 1
      %p112 = por %p110, %p111
      %p114 = scmp.ne.s32.totalorder %s97, %s113
      %p115 = scmp.eq.s32.totalorder %s37, 0
      %p116 = por %p114, %p115
      %s118 = sadd.s32 %s117, 1
      %p121 = scmp.eq.s32.totalorder %s31, 1
      %p122 = scmp.ne.s32.totalorder %s117, %s119
      %p123 = scmp.eq.s32.totalorder %s31, 0
      %p124 = por %p122, %p123
      %p125 = scmp.ne.s32.totalorder %s117, %s119
      %p126 = scmp.eq.s32.totalorder %s36, 1
      %p127 = por %p125, %p126
      %p128 = scmp.ne.s32.totalorder %s119, %s120
      %p129 = scmp.eq.s32.totalorder %s36, 0
      %p130 = por %p128, %p129
      %p131 = scmp.ne.s32.totalorder %s119, %s120
      %p132 = scmp.eq.s32.totalorder %s37, 1
      %p133 = por %p131, %p132
      %p135 = scmp.ne.s32.totalorder %s120, %s134
      %p136 = scmp.eq.s32.totalorder %s37, 0
      %p137 = por %p135, %p136
      %s139 = sadd.s32 %s138, 1
      %p142 = scmp.eq.s32.totalorder %s31, 1
      %p143 = scmp.ne.s32.totalorder %s138, %s140
      %p144 = scmp.eq.s32.totalorder %s31, 0
      %p145 = por %p143, %p144
      %p146 = scmp.ne.s32.totalorder %s138, %s140
      %p147 = scmp.eq.s32.totalorder %s36, 1
      %p148 = por %p146, %p147
      %p149 = scmp.ne.s32.totalorder %s140, %s141
      %p150 = scmp.eq.s32.totalorder %s36, 0
      %p151 = por %p149, %p150
      %p152 = scmp.ne.s32.totalorder %s140, %s141
      %p153 = scmp.eq.s32.totalorder %s37, 1
      %p154 = por %p152, %p153
      %p156 = scmp.ne.s32.totalorder %s141, %s155
      %p157 = scmp.eq.s32.totalorder %s37, 0
      %p158 = por %p156, %p157
      %s160 = sadd.s32 %s159, 1
      %p163 = scmp.eq.s32.totalorder %s31, 1
      %p164 = scmp.ne.s32.totalorder %s159, %s161
      %p165 = scmp.eq.s32.totalorder %s31, 0
      %p166 = por %p164, %p165
      %p167 = scmp.ne.s32.totalorder %s159, %s161
      %p168 = scmp.eq.s32.totalorder %s36, 1
      %p169 = por %p167, %p168
      %p170 = scmp.ne.s32.totalorder %s161, %s162
      %p171 = scmp.eq.s32.totalorder %s36, 0
      %p172 = por %p170, %p171
      %p173 = scmp.ne.s32.totalorder %s161, %s162
      %p174 = scmp.eq.s32.totalorder %s37, 1
      %p175 = por %p173, %p174
      %p177 = scmp.ne.s32.totalorder %s162, %s176
      %p178 = scmp.eq.s32.totalorder %s37, 0
      %p179 = por %p177, %p178
      %s181 = sadd.s32 %s180, 1
      %p184 = scmp.eq.s32.totalorder %s31, 1
      %p185 = scmp.ne.s32.totalorder %s180, %s182
      %p186 = scmp.eq.s32.totalorder %s31, 0
      %p187 = por %p185, %p186
      %p188 = scmp.ne.s32.totalorder %s180, %s182
      %p189 = scmp.eq.s32.totalorder %s36, 1
      %p190 = por %p188, %p189
      %p191 = scmp.ne.s32.totalorder %s182, %s183
      %p192 = scmp.eq.s32.totalorder %s36, 0
      %p193 = por %p191, %p192
      %p194 = scmp.ne.s32.totalorder %s182, %s183
      %p195 = scmp.eq.s32.totalorder %s37, 1
      %p196 = por %p194, %p195
      %p198 = scmp.ne.s32.totalorder %s183, %s197
      %p199 = scmp.eq.s32.totalorder %s37, 0
      %p200 = por %p198, %p199
      %s202 = sadd.s32 %s201, 1
      %p205 = scmp.eq.s32.totalorder %s31, 1
      %p206 = scmp.ne.s32.totalorder %s201, %s203
      %p207 = scmp.eq.s32.totalorder %s31, 0
      %p208 = por %p206, %p207
      %p209 = scmp.ne.s32.totalorder %s201, %s203
      %p210 = scmp.eq.s32.totalorder %s36, 1
      %p211 = por %p209, %p210
      %p212 = scmp.ne.s32.totalorder %s203, %s204
      %p213 = scmp.eq.s32.totalorder %s36, 0
      %p214 = por %p212, %p213
      %p215 = scmp.ne.s32.totalorder %s203, %s204
      %p216 = scmp.eq.s32.totalorder %s37, 1
      %p217 = por %p215, %p216
      %p219 = scmp.ne.s32.totalorder %s204, %s218
      %p220 = scmp.eq.s32.totalorder %s37, 0
      %p221 = por %p219, %p220
      %s223 = sadd.s32 %s222, 1
      %p226 = scmp.eq.s32.totalorder %s31, 1
      %p227 = scmp.ne.s32.totalorder %s222, %s224
      %p228 = scmp.eq.s32.totalorder %s31, 0
      %p229 = por %p227, %p228
      %p230 = scmp.ne.s32.totalorder %s222, %s224
      %p231 = scmp.eq.s32.totalorder %s36, 1
      %p232 = por %p230, %p231
      %p233 = scmp.ne.s32.totalorder %s224, %s225
      %p234 = scmp.eq.s32.totalorder %s36, 0
      %p235 = por %p233, %p234
      %p236 = scmp.ne.s32.totalorder %s224, %s225
      %p237 = scmp.eq.s32.totalorder %s37, 1
      %p238 = por %p236, %p237
      %p240 = scmp.ne.s32.totalorder %s225, %s239
      %p241 = scmp.eq.s32.totalorder %s37, 0
      %p242 = por %p240, %p241
      %s243 = ssub.s32 %s31, %s38
      %p244 = scmp.eq.s32.totalorder %s243, 0
      %s246 = sadd.s32 %s245, 1
      %s247 = scalar_select %p244, %s245, %s246
      %p250 = pneg %p244
      %p251 = scmp.eq.s32.totalorder %s31, 1
      %p252 = por %p250, %p251
      %p253 = scmp.ne.s32.totalorder %s245, %s248
      %p254 = scmp.eq.s32.totalorder %s31, 0
      %p255 = por %p253, %p254
      %p256 = scmp.ne.s32.totalorder %s245, %s248
      %p257 = scmp.eq.s32.totalorder %s36, 1
      %p258 = por %p256, %p257
      %p259 = scmp.ne.s32.totalorder %s248, %s249
      %p260 = scmp.eq.s32.totalorder %s36, 0
      %p261 = por %p259, %p260
      %p262 = scmp.ne.s32.totalorder %s248, %s249
      %p263 = scmp.eq.s32.totalorder %s37, 1
      %p264 = por %p262, %p263
      %p266 = scmp.ne.s32.totalorder %s249, %s265
      %p267 = scmp.eq.s32.totalorder %s37, 0
      %p268 = por %p266, %p267
      %s269 = ssub.s32 %s31, %s38
      %p270 = scmp.eq.s32.totalorder %s269, 0
      %s272 = sadd.s32 %s271, 1
      %s273 = scalar_select %p270, %s271, %s272
      %p276 = pneg %p270
      %p277 = scmp.eq.s32.totalorder %s31, 1
      %p278 = por %p276, %p277
      %p279 = scmp.ne.s32.totalorder %s271, %s274
      %p280 = scmp.eq.s32.totalorder %s31, 0
      %p281 = por %p279, %p280
      %p282 = scmp.ne.s32.totalorder %s271, %s274
      %p283 = scmp.eq.s32.totalorder %s36, 1
      %p284 = por %p282, %p283
      %p285 = scmp.ne.s32.totalorder %s274, %s275
      %p286 = scmp.eq.s32.totalorder %s36, 0
      %p287 = por %p285, %p286
      %p288 = scmp.ne.s32.totalorder %s274, %s275
      %p289 = scmp.eq.s32.totalorder %s37, 1
      %p290 = por %p288, %p289
      %p292 = scmp.ne.s32.totalorder %s275, %s291
      %p293 = scmp.eq.s32.totalorder %s37, 0
      %p294 = por %p292, %p293
      %p295 = scmp.le.s32.totalorder 1, %s31
      %p296 = scmp.lt.s32.totalorder %s31, 3
      %p297 = pnand %p295, %p296
      %p298 = pneg %p297
      // Predicated region
      $region9: #{tpu_custom_call.1} parent=5 // pred_check
        _
      $region10: #{tpu_custom_call.1} parent=5 // pred_check_branch
        %300 = sbr.rel (%p297) target = $region12
      $region11: #{tpu_custom_call.1} parent=5 // pred_region
        %s301 = ssub.s32 %s31, 1
        // Predicated region
        $region13: #{tpu_custom_call.1} parent=11 // pred_check
          %p302 = pneg %p130
        $region14: #{tpu_custom_call.1} parent=11 // pred_check_branch
          %304 = sbr.rel (%p302) target = $region16
        $region15: #{tpu_custom_call.1} parent=11 // pred_region
          _
        $region16: #{tpu_custom_call.1} parent=11 // pred_fallthru
          _
        // Predicated region
        $region17: #{tpu_custom_call.1} parent=11 // pred_check
          %p305 = pneg %p151
        $region18: #{tpu_custom_call.1} parent=11 // pred_check_branch
          %307 = sbr.rel (%p305) target = $region20
        $region19: #{tpu_custom_call.1} parent=11 // pred_region
          _
        $region20: #{tpu_custom_call.1} parent=11 // pred_fallthru
          _
        // Predicated region
        $region21: #{tpu_custom_call.1} parent=11 // pred_check
          %p308 = pneg %p172
        $region22: #{tpu_custom_call.1} parent=11 // pred_check_branch
          %310 = sbr.rel (%p308) target = $region24
        $region23: #{tpu_custom_call.1} parent=11 // pred_region
          _
        $region24: #{tpu_custom_call.1} parent=11 // pred_fallthru
          _
        // Predicated region
        $region25: #{tpu_custom_call.1} parent=11 // pred_check
          %p311 = pneg %p193
        $region26: #{tpu_custom_call.1} parent=11 // pred_check_branch
          %313 = sbr.rel (%p311) target = $region28
        $region27: #{tpu_custom_call.1} parent=11 // pred_region
          _
        $region28: #{tpu_custom_call.1} parent=11 // pred_fallthru
          _
        // Predicated region
        $region29: #{tpu_custom_call.1} parent=11 // pred_check
          %p314 = pneg %p214
        $region30: #{tpu_custom_call.1} parent=11 // pred_check_branch
          %316 = sbr.rel (%p314) target = $region32
        $region31: #{tpu_custom_call.1} parent=11 // pred_region
          _
        $region32: #{tpu_custom_call.1} parent=11 // pred_fallthru
          _
        // Predicated region
        $region33: #{tpu_custom_call.1} parent=11 // pred_check
          %p317 = pneg %p235
        $region34: #{tpu_custom_call.1} parent=11 // pred_check_branch
          %319 = sbr.rel (%p317) target = $region36
        $region35: #{tpu_custom_call.1} parent=11 // pred_region
          _
        $region36: #{tpu_custom_call.1} parent=11 // pred_fallthru
          _
      $region12: #{tpu_custom_call.1} parent=5 // pred_fallthru
        _
      %p320 = scmp.lt.s32.totalorder %s31, 2
      // Predicated region
      $region37: #{tpu_custom_call.1} parent=5 // pred_check
        %p321 = pneg %p320
      $region38: #{tpu_custom_call.1} parent=5 // pred_check_branch
        %323 = sbr.rel (%p321) target = $region40
      $region39: #{tpu_custom_call.1} parent=5 // pred_region
        // Predicated region
        $region41: #{tpu_custom_call.1} parent=39 // pred_check
          %p324 = pneg %p51
        $region42: #{tpu_custom_call.1} parent=39 // pred_check_branch
          %326 = sbr.rel (%p324) target = $region44
        $region43: #{tpu_custom_call.1} parent=39 // pred_region
          %p327 = scmp.lt.s32.totalorder %s31, 1
          %s328 = scalar_select %p327, %s31, 1
          %s329 = smul.addr %s328, 2
          %s330 = scalar_lea.vmem %s1, %s329
        $region44: #{tpu_custom_call.1} parent=39 // pred_fallthru
          _
        // Predicated region
        $region45: #{tpu_custom_call.1} parent=39 // pred_check
          %p331 = pneg %p77
        $region46: #{tpu_custom_call.1} parent=39 // pred_check_branch
          %333 = sbr.rel (%p331) target = $region48
        $region47: #{tpu_custom_call.1} parent=39 // pred_region
          %s334 = sand.u32 %s67, 1
          %s335 = scalar_lea.sflag [#allocation6], %s334
          %s336 = sand.u32 %s67, 1
          %s337 = smul.addr %s336, 16
          %s338 = scalar_lea.vmem [#allocation5], %s337
          %s340 = ssub.s32 256, 256
          %341 = vsyncadd %s335, %s340
          %s342 = smul.addr %s31, 16
          %s343 = smul.addr %s342, 16
          %s344 = scalar_lea.hbm %s2, %s343
          %s345 = sshll.u32 %s338, 4
          %s346 = int_to_ptr.vmem [resolvable:$true] %s345
          %351 = dma.hbm_to_vmem [thread:$0]  %s344, 256, %s346, %s335, 32, 32, 2
        $region48: #{tpu_custom_call.1} parent=39 // pred_fallthru
          _
        // Predicated region
        $region49: #{tpu_custom_call.1} parent=39 // pred_check
          %p352 = pneg %p103
        $region50: #{tpu_custom_call.1} parent=39 // pred_check_branch
          %354 = sbr.rel (%p352) target = $region52
        $region51: #{tpu_custom_call.1} parent=39 // pred_region
          %p355 = scmp.lt.s32.totalorder %s31, 1
          %s356 = scalar_select %p355, %s31, 1
          %s357 = smul.addr %s356, 2
          %s358 = scalar_lea.vmem %s3, %s357
        $region52: #{tpu_custom_call.1} parent=39 // pred_fallthru
          _
      $region40: #{tpu_custom_call.1} parent=5 // pred_fallthru
        _
      %p359 = scmp.le.s32.totalorder 1, %s31
      %p360 = scmp.lt.s32.totalorder %s31, 3
      %p361 = pnand %p359, %p360
      %p362 = pneg %p361
      // Predicated region
      $region53: #{tpu_custom_call.1} parent=5 // pred_check
        _
      $region54: #{tpu_custom_call.1} parent=5 // pred_check_branch
        %364 = sbr.rel (%p361) target = $region56
      $region55: #{tpu_custom_call.1} parent=5 // pred_region
        %s365 = ssub.s32 %s31, 1
        %s366 = sand.u32 %s70, 1
        %s367 = scalar_lea.sflag [#allocation6], %s366
        %s368 = sand.u32 %s70, 1
        %s369 = smul.addr %s368, 16
        %s370 = scalar_lea.vmem [#allocation5], %s369
        // Predicated region
        $region57: #{tpu_custom_call.1} parent=55 // pred_check
          %p371 = pneg %p83
        $region58: #{tpu_custom_call.1} parent=55 // pred_check_branch
          %373 = sbr.rel (%p371) target = $region60
        $region59: #{tpu_custom_call.1} parent=55 // pred_region
          %374 = dma.done %s367, 256
        $region60: #{tpu_custom_call.1} parent=55 // pred_fallthru
          _
        %p375 = scmp.lt.s32.totalorder %s36, 1
        %s376 = scalar_select %p375, %s36, 1
        %s377 = smul.addr %s376, 2
        %s378 = scalar_lea.vmem %s1, %s377
        %p379 = pneg %p57
        %p380 = pneg %p54
        %s381 = sand.u32 %s70, 1
        %s382 = scalar_lea.sflag [#allocation6], %s381
        %s383 = sand.u32 %s70, 1
        %s384 = smul.addr %s383, 16
        %s385 = scalar_lea.vmem [#allocation5], %s384
        %p386 = pneg %p83
        %p387 = pneg %p80
        %p388 = scmp.lt.s32.totalorder %s36, 1
        %s389 = scalar_select %p388, %s36, 1
        %s390 = smul.addr %s389, 2
        %s391 = scalar_lea.vmem %s3, %s390
        %p392 = pneg %p109
        %p393 = pneg %p106
        %p394 = pneg %p130
        %p395 = pneg %p127
        %p396 = pneg %p151
        %p397 = pneg %p148
        %p398 = pneg %p172
        %p399 = pneg %p169
        %p400 = pneg %p193
        %p401 = pneg %p190
        %p402 = pneg %p214
        %p403 = pneg %p211
        %p404 = pneg %p235
        %p405 = pneg %p232
        %p406 = pneg %p261
        %p407 = pneg %p258
        %s408 = sand.u32 %s248, 1
        %s409 = scalar_lea.sflag [#allocation7], %s408
        %s410 = sand.u32 %s248, 1
        %s411 = smul.addr %s410, 8
        %s412 = scalar_lea.vmem [#allocation8], %s411
        %p413 = pneg %p287
        %p414 = pneg %p284
        %s415 = sand.u32 %s274, 1
        %s416 = scalar_lea.sflag [#allocation10], %s415
        %s417 = sand.u32 %s274, 1
        %s418 = smul.addr %s417, 16
        %s419 = scalar_lea.vmem [#allocation9], %s418
        %p420 = scmp.lt.s32.totalorder %s36, 1
        %s421 = scalar_select %p420, %s36, 1
        %s422 = smul.addr %s421, 2
        %s423 = scalar_lea.vmem %s1, %s422
        %p424 = scmp.lt.s32.totalorder %s36, 1
        %s425 = scalar_select %p424, %s36, 1
        %s426 = smul.addr %s425, 2
        %s427 = scalar_lea.vmem %s3, %s426
        %s428 = smul.u32 %s36, 8
        %v429 = vld [vmem:[%s427] sm:$0x3]
        %v430 = vld [vmem:[%s4] sm:$0xff]
        %v431 = vld [vmem:[%s5] sm:$0xff]
        %v432 = vld [vmem:[%s6] sm:$0xff]
        %v433 = vld [vmem:[%s7] sm:$0x1]
        %v434 = vld [vmem:[%s8] sm:$0xff]
        %v435 = vld [vmem:[%s8 + $0x8] sm:$0xff]
        %v436 = vld [vmem:[%s9] sm:$0x3]
        %v437 = vmul.f32 %v430, 0.16666667
        %v438 = vsub.f32 %v431, %v430
        %v439 = vlaneseq
        %v440 = vshrl.u32 %v439, 7
        %v441 = vlaneseq
        %v442 = vand.u32 %v441, 127
        %vm443 = vcmp.eq.s32.totalorder %v440, %v442
        %v444 = vsel %vm443, 1, 0
        %v445 = vcvt.s32.f32 %v444
        %s446 = sld [smem:[#allocation4 + %s428]]
        %s447 = scvt.s32.f32 %s446
        %s448 = smul.f32 %s447, 0.11111111
        %v449 = vld [vmem:[%s370] sm:$0x3]
        %451 = vset.pattern.permute.xlu0 1
        %452 = vperm.xlu0 %451, %v430
        %v453 = vpop.permute.xlu0 %452
        %v456 = vlaneseq
        %v457 = vshrl.u32 %v456, 7
        %v458 = vsub.s32 0, %v457
        %v459 = vrot.slane %v449, %v458
        %v460 = vlaneseq
        %v461 = vshrl.u32 %v460, 7
        %v462 = vsub.s32 1, %v461
        %v463 = vrot.slane %v449, %v462
        %v466 = vmul.f32 %v453, %v459
        %v467 = vmul.f32 %v453, %v463
        %v468 = vstv %s448
        %v469 = vmul.f32 %v430, %v468
        %471 = vrot.lane.b32.xlu0 %v438, 2
        %v472 = vpop.permute.xlu0 %471
        %v474 = vadd.f32 %v469, %v472
        %476 = vset.pattern.permute.xlu0 2
        %477 = vperm.xlu0 %476, %v474
        %v478 = vpop.permute.xlu0 %477
        %v480 = vadd.f32 %v466, %v478
        %v481 = vadd.f32 %v467, %v478
        %482 = vst [vmem:[#allocation2] sm:$0xff] %v480
        %483 = vst [vmem:[#allocation2 + $0x8] sm:$0xff] %v481
        %s484 = sadd.s32 %s428, 1
        %s485 = sld [smem:[#allocation4 + %s484]]
        %s486 = scvt.s32.f32 %s485
        %s487 = smul.f32 %s486, 0.11111111
        %s488 = scalar_lea.vmem %s370, 2 [#allocation5]
        %v489 = vld [vmem:[%s488] sm:$0x3]
        %v491 = vlaneseq
        %v492 = vshrl.u32 %v491, 7
        %v493 = vsub.s32 0, %v492
        %v494 = vrot.slane %v489, %v493
        %v495 = vlaneseq
        %v496 = vshrl.u32 %v495, 7
        %v497 = vsub.s32 1, %v496
        %v498 = vrot.slane %v489, %v497
        %v501 = vmul.f32 %v453, %v494
        %v502 = vmul.f32 %v453, %v498
        %v503 = vstv %s487
        %v504 = vmul.f32 %v430, %v503
        %v505 = vadd.f32 %v504, %v472
        %507 = vset.pattern.permute.xlu0 2
        %508 = vperm.xlu0 %507, %v505
        %v509 = vpop.permute.xlu0 %508
        %v511 = vadd.f32 %v501, %v509
        %v512 = vadd.f32 %v502, %v509
        %s513 = scalar_lea.vmem [#allocation2], 16
        %514 = vst [vmem:[%s513] sm:$0xff] %v511
        %515 = vst [vmem:[%s513 + $0x8] sm:$0xff] %v512
        %s516 = sadd.s32 %s428, 2
        %s517 = sld [smem:[#allocation4 + %s516]]
        %s518 = scvt.s32.f32 %s517
        %s519 = smul.f32 %s518, 0.11111111
        %s520 = scalar_lea.vmem %s370, 4 [#allocation5]
        %v521 = vld [vmem:[%s520] sm:$0x3]
        %v523 = vlaneseq
        %v524 = vshrl.u32 %v523, 7
        %v525 = vsub.s32 0, %v524
        %v526 = vrot.slane %v521, %v525
        %v527 = vlaneseq
        %v528 = vshrl.u32 %v527, 7
        %v529 = vsub.s32 1, %v528
        %v530 = vrot.slane %v521, %v529
        %v533 = vmul.f32 %v453, %v526
        %v534 = vmul.f32 %v453, %v530
        %v535 = vstv %s519
        %v536 = vmul.f32 %v430, %v535
        %v537 = vadd.f32 %v536, %v472
        %539 = vset.pattern.permute.xlu0 2
        %540 = vperm.xlu0 %539, %v537
        %v541 = vpop.permute.xlu0 %540
        %v543 = vadd.f32 %v533, %v541
        %v544 = vadd.f32 %v534, %v541
        %s545 = scalar_lea.vmem [#allocation2], 32
        %546 = vst [vmem:[%s545] sm:$0xff] %v543
        %547 = vst [vmem:[%s545 + $0x8] sm:$0xff] %v544
        %s548 = sadd.s32 %s428, 3
        %s549 = sld [smem:[#allocation4 + %s548]]
        %s550 = scvt.s32.f32 %s549
        %s551 = smul.f32 %s550, 0.11111111
        %s552 = scalar_lea.vmem %s370, 6 [#allocation5]
        %v553 = vld [vmem:[%s552] sm:$0x3]
        %v555 = vlaneseq
        %v556 = vshrl.u32 %v555, 7
        %v557 = vsub.s32 0, %v556
        %v558 = vrot.slane %v553, %v557
        %v559 = vlaneseq
        %v560 = vshrl.u32 %v559, 7
        %v561 = vsub.s32 1, %v560
        %v562 = vrot.slane %v553, %v561
        %v565 = vmul.f32 %v453, %v558
        %v566 = vmul.f32 %v453, %v562
        %v567 = vstv %s551
        %v568 = vmul.f32 %v430, %v567
        %v569 = vadd.f32 %v568, %v472
        %571 = vset.pattern.permute.xlu0 2
        %572 = vperm.xlu0 %571, %v569
        %v573 = vpop.permute.xlu0 %572
        %v575 = vadd.f32 %v565, %v573
        %v576 = vadd.f32 %v566, %v573
        %s577 = scalar_lea.vmem [#allocation2], 48
        %578 = vst [vmem:[%s577] sm:$0xff] %v575
        %579 = vst [vmem:[%s577 + $0x8] sm:$0xff] %v576
        %s580 = sadd.s32 %s428, 4
        %s581 = sld [smem:[#allocation4 + %s580]]
        %s582 = scvt.s32.f32 %s581
        %s583 = smul.f32 %s582, 0.11111111
        %s584 = scalar_lea.vmem %s370, 8 [#allocation5]
        %v585 = vld [vmem:[%s584] sm:$0x3]
        %v587 = vlaneseq
        %v588 = vshrl.u32 %v587, 7
        %v589 = vsub.s32 0, %v588
        %v590 = vrot.slane %v585, %v589
        %v591 = vlaneseq
        %v592 = vshrl.u32 %v591, 7
        %v593 = vsub.s32 1, %v592
        %v594 = vrot.slane %v585, %v593
        %v597 = vmul.f32 %v453, %v590
        %v598 = vmul.f32 %v453, %v594
        %v599 = vstv %s583
        %v600 = vmul.f32 %v430, %v599
        %v601 = vadd.f32 %v600, %v472
        %603 = vset.pattern.permute.xlu0 2
        %604 = vperm.xlu0 %603, %v601
        %v605 = vpop.permute.xlu0 %604
        %v607 = vadd.f32 %v597, %v605
        %v608 = vadd.f32 %v598, %v605
        %s609 = scalar_lea.vmem [#allocation2], 64
        %610 = vst [vmem:[%s609] sm:$0xff] %v607
        %611 = vst [vmem:[%s609 + $0x8] sm:$0xff] %v608
        %s612 = sadd.s32 %s428, 5
        %s613 = sld [smem:[#allocation4 + %s612]]
        %s614 = scvt.s32.f32 %s613
        %s615 = smul.f32 %s614, 0.11111111
        %s616 = scalar_lea.vmem %s370, 10 [#allocation5]
        %v617 = vld [vmem:[%s616] sm:$0x3]
        %v619 = vlaneseq
        %v620 = vshrl.u32 %v619, 7
        %v621 = vsub.s32 0, %v620
        %v622 = vrot.slane %v617, %v621
        %v623 = vlaneseq
        %v624 = vshrl.u32 %v623, 7
        %v625 = vsub.s32 1, %v624
        %v626 = vrot.slane %v617, %v625
        %v629 = vmul.f32 %v453, %v622
        %v630 = vmul.f32 %v453, %v626
        %v631 = vstv %s615
        %v632 = vmul.f32 %v430, %v631
        %v633 = vadd.f32 %v632, %v472
        %635 = vset.pattern.permute.xlu0 2
        %636 = vperm.xlu0 %635, %v633
        %v637 = vpop.permute.xlu0 %636
        %v639 = vadd.f32 %v629, %v637
        %v640 = vadd.f32 %v630, %v637
        %s641 = scalar_lea.vmem [#allocation2], 80
        %642 = vst [vmem:[%s641] sm:$0xff] %v639
        %643 = vst [vmem:[%s641 + $0x8] sm:$0xff] %v640
        %s644 = sadd.s32 %s428, 6
        %s645 = sld [smem:[#allocation4 + %s644]]
        %s646 = scvt.s32.f32 %s645
        %s647 = smul.f32 %s646, 0.11111111
        %s648 = scalar_lea.vmem %s370, 12 [#allocation5]
        %v649 = vld [vmem:[%s648] sm:$0x3]
        %v651 = vlaneseq
        %v652 = vshrl.u32 %v651, 7
        %v653 = vsub.s32 0, %v652
        %v654 = vrot.slane %v649, %v653
        %v655 = vlaneseq
        %v656 = vshrl.u32 %v655, 7
        %v657 = vsub.s32 1, %v656
        %v658 = vrot.slane %v649, %v657
        %v661 = vmul.f32 %v453, %v654
        %v662 = vmul.f32 %v453, %v658
        %v663 = vstv %s647
        %v664 = vmul.f32 %v430, %v663
        %v665 = vadd.f32 %v664, %v472
        %667 = vset.pattern.permute.xlu0 2
        %668 = vperm.xlu0 %667, %v665
        %v669 = vpop.permute.xlu0 %668
        %v671 = vadd.f32 %v661, %v669
        %v672 = vadd.f32 %v662, %v669
        %s673 = scalar_lea.vmem [#allocation2], 96
        %674 = vst [vmem:[%s673] sm:$0xff] %v671
        %675 = vst [vmem:[%s673 + $0x8] sm:$0xff] %v672
        %s676 = sadd.s32 %s428, 7
        %s677 = sld [smem:[#allocation4 + %s676]]
        %s678 = scvt.s32.f32 %s677
        %s679 = smul.f32 %s678, 0.11111111
        %s680 = scalar_lea.vmem %s370, 14 [#allocation5]
        %v681 = vld [vmem:[%s680] sm:$0x3]
        %v683 = vlaneseq
        %v684 = vshrl.u32 %v683, 7
        %v685 = vsub.s32 0, %v684
        %v686 = vrot.slane %v681, %v685
        %v687 = vlaneseq
        %v688 = vshrl.u32 %v687, 7
        %v689 = vsub.s32 1, %v688
        %v690 = vrot.slane %v681, %v689
        %v693 = vmul.f32 %v453, %v686
        %v694 = vmul.f32 %v453, %v690
        %v695 = vstv %s679
        %v696 = vmul.f32 %v430, %v695
        %v697 = vadd.f32 %v696, %v472
        %699 = vset.pattern.permute.xlu0 2
        %700 = vperm.xlu0 %699, %v697
        %v701 = vpop.permute.xlu0 %700
        %v703 = vadd.f32 %v693, %v701
        %v704 = vadd.f32 %v694, %v701
        %s705 = scalar_lea.vmem [#allocation2], 112
        %706 = vst [vmem:[%s705] sm:$0xff] %v703
        %707 = vst [vmem:[%s705 + $0x8] sm:$0xff] %v704
        %v708 = vld [vmem:[%s423] sm:$0x3]
        %710 = vset.pattern.permute.xlu0 0
        %711 = vperm.xlu0 %710, %v437
        %v712 = vpop.permute.xlu0 %711
        %v715 = vlaneseq
        %v716 = vshrl.u32 %v715, 7
        %v717 = vsub.s32 0, %v716
        %v718 = vrot.slane %v708, %v717
        %v719 = vlaneseq
        %v720 = vshrl.u32 %v719, 7
        %v721 = vsub.s32 1, %v720
        %v722 = vrot.slane %v708, %v721
        %v725 = vmul.f32 %v712, %v718
        %v726 = vmul.f32 %v712, %v722
        %v727 = vld [vmem:[#allocation2] sm:$0xff]
        %v728 = vld [vmem:[#allocation2 + $0x8] sm:$0xff]
        %v729 = vadd.f32 %v725, %v727
        %v730 = vadd.f32 %v726, %v728
        %v731 = vmax.f32 %v729, 0.0
        %v732 = vmax.f32 %v730, 0.0
        %v733 = vadd.f32 %v731, %v732
        %734 = vadd.xlane.f32.xlu0 %v733
        %v735 = vpop.xlane.xlu0 %734
        %v736 = vmul.f32 %v432, %v735
        %v737 = vrot.slane %v736, 4
        %v738 = vadd.f32 %v736, %v737
        %v739 = vrot.slane %v738, 2
        %v740 = vadd.f32 %v738, %v739
        %v741 = vrot.slane %v740, 1
        %v742 = vadd.f32 %v740, %v741
        %v743 = vadd.f32 %v742, %v433
        %v744 = vxor.u32 %v743, 2147483648
        %v745 = vmul.f32 %v744, 1.442695
        %v746 = vpow.pop %v745
        %v747 = vadd.f32 %v746, 1.0
        %v748 = vrcp.pop %v747
        %v749 = vmul.f32 1.0, %v748
        %750 = vst [vmem:[%s412] sm:$0x1] %v749
        %v751 = vlaneseq
        %v752 = vshrl.u32 %v751, 7
        %v753 = vsub.s32 0, %v752
        %v754 = vrot.slane %v749, %v753
        %v755 = vmul.f32 %v754, %v445
        %756 = vadd.xlane.f32.xlu0 %v755
        %v757 = vpop.xlane.xlu0 %756
        %v758 = vmul.f32 %v757, %v434
        %v759 = vmul.f32 %v757, %v435
        %v760 = vrot.slane %v758, 4
        %v761 = vadd.f32 %v758, %v760
        %v762 = vrot.slane %v761, 2
        %v763 = vadd.f32 %v761, %v762
        %v764 = vrot.slane %v763, 1
        %v765 = vadd.f32 %v763, %v764
        %v766 = vrot.slane %v759, 4
        %v767 = vadd.f32 %v759, %v766
        %v768 = vrot.slane %v767, 2
        %v769 = vadd.f32 %v767, %v768
        %v770 = vrot.slane %v769, 1
        %v771 = vadd.f32 %v769, %v770
        %v773 = vlaneseq
        %v774 = vshrl.u32 %v773, 7
        %v775 = vsub.s32 0, %v774
        %v776 = vrot.slane %v436, %v775
        %v777 = vlaneseq
        %v778 = vshrl.u32 %v777, 7
        %v779 = vsub.s32 1, %v778
        %v780 = vrot.slane %v436, %v779
        %v783 = vadd.f32 %v765, %v776
        %v784 = vadd.f32 %v771, %v780
        %v785 = vxor.u32 %v783, 2147483648
        %v786 = vxor.u32 %v784, 2147483648
        %v787 = vmul.f32 %v785, 1.442695
        %v788 = vpow.pop %v787
        %v789 = vmul.f32 %v786, 1.442695
        %v790 = vpow.pop %v789
        %v791 = vadd.f32 %v788, 1.0
        %v792 = vadd.f32 %v790, 1.0
        %v793 = vrcp.pop %v791
        %v794 = vmul.f32 1.0, %v793
        %v795 = vrcp.pop %v792
        %v796 = vmul.f32 1.0, %v795
        %v798 = vlaneseq
        %v799 = vshrl.u32 %v798, 7
        %v800 = vsub.s32 0, %v799
        %v801 = vrot.slane %v429, %v800
        %v802 = vlaneseq
        %v803 = vshrl.u32 %v802, 7
        %v804 = vsub.s32 1, %v803
        %v805 = vrot.slane %v429, %v804
        %v808 = vmul.f32 %v794, %v801
        %v809 = vmul.f32 %v796, %v805
        %s810 = sld [smem:[#allocation4 + %s428]]
        %s811 = scvt.s32.f32 %s810
        %v812 = vstv %s811
        %v813 = vsub.f32 %v812, %v708
        %v815 = vlaneseq
        %v816 = vshrl.u32 %v815, 7
        %v817 = vsub.s32 0, %v816
        %v818 = vrot.slane %v813, %v817
        %v819 = vlaneseq
        %v820 = vshrl.u32 %v819, 7
        %v821 = vsub.s32 1, %v820
        %v822 = vrot.slane %v813, %v821
        %v825 = vmul.f32 %v808, %v818
        %v826 = vmul.f32 %v809, %v822
        %v829 = vcombine.low %v825, %v826
        %v831 = vunpack.c.l.s4 1966171168
        %v832 = vunpack.c.0.s8 %v831
        %v833 = vlaneseq
        %v834 = vshrl.u32 %v833, 7
        %v835 = vsub.s32 %v832, %v834
        %v836 = vrot.slane %v829, %v835
        %v838 = vunpack.c.l.s4 1966171168
        %v839 = vunpack.c.0.s8 %v838
        %v840 = vlaneseq
        %v841 = vshrl.u32 %v840, 7
        %v842 = vsub.s32 %v839, %v841
        %v843 = vrot.slane %v836, %v842
        %v845 = vadd.f32 %v708, %v843
        %v846 = vlaneseq
        %vm847 = vcmp.ge.s32.totalorder %v846, 0
        %vm848 = vcmp.lt.s32.totalorder %v846, 256
        %vm849 = vmand %vm847, %vm848
        %850 = vst.msk [vmem:[%s419] sm:$0x3] %vm849, %v845
        %v852 = vlaneseq
        %v853 = vshrl.u32 %v852, 7
        %v854 = vsub.s32 0, %v853
        %v855 = vrot.slane %v845, %v854
        %v856 = vlaneseq
        %v857 = vshrl.u32 %v856, 7
        %v858 = vsub.s32 1, %v857
        %v859 = vrot.slane %v845, %v858
        %v862 = vmul.f32 %v712, %v855
        %v863 = vmul.f32 %v712, %v859
        %v864 = vld [vmem:[%s513] sm:$0xff]
        %v865 = vld [vmem:[%s513 + $0x8] sm:$0xff]
        %v866 = vadd.f32 %v862, %v864
        %v867 = vadd.f32 %v863, %v865
        %v868 = vmax.f32 %v866, 0.0
        %v869 = vmax.f32 %v867, 0.0
        %v870 = vadd.f32 %v868, %v869
        %871 = vadd.xlane.f32.xlu0 %v870
        %v872 = vpop.xlane.xlu0 %871
        %v873 = vmul.f32 %v432, %v872
        %v874 = vrot.slane %v873, 4
        %v875 = vadd.f32 %v873, %v874
        %v876 = vrot.slane %v875, 2
        %v877 = vadd.f32 %v875, %v876
        %v878 = vrot.slane %v877, 1
        %v879 = vadd.f32 %v877, %v878
        %v880 = vadd.f32 %v879, %v433
        %v881 = vxor.u32 %v880, 2147483648
        %v882 = vmul.f32 %v881, 1.442695
        %v883 = vpow.pop %v882
        %v884 = vadd.f32 %v883, 1.0
        %v885 = vrcp.pop %v884
        %v886 = vmul.f32 1.0, %v885
        %s887 = scalar_lea.vmem %s412, 1 [#allocation8]
        %888 = vst [vmem:[%s887] sm:$0x1] %v886
        %v889 = vlaneseq
        %v890 = vshrl.u32 %v889, 7
        %v891 = vsub.s32 0, %v890
        %v892 = vrot.slane %v886, %v891
        %v893 = vmul.f32 %v892, %v445
        %894 = vadd.xlane.f32.xlu0 %v893
        %v895 = vpop.xlane.xlu0 %894
        %v896 = vmul.f32 %v895, %v434
        %v897 = vmul.f32 %v895, %v435
        %v898 = vrot.slane %v896, 4
        %v899 = vadd.f32 %v896, %v898
        %v900 = vrot.slane %v899, 2
        %v901 = vadd.f32 %v899, %v900
        %v902 = vrot.slane %v901, 1
        %v903 = vadd.f32 %v901, %v902
        %v904 = vrot.slane %v897, 4
        %v905 = vadd.f32 %v897, %v904
        %v906 = vrot.slane %v905, 2
        %v907 = vadd.f32 %v905, %v906
        %v908 = vrot.slane %v907, 1
        %v909 = vadd.f32 %v907, %v908
        %v910 = vadd.f32 %v903, %v776
        %v911 = vadd.f32 %v909, %v780
        %v912 = vxor.u32 %v910, 2147483648
        %v913 = vxor.u32 %v911, 2147483648
        %v914 = vmul.f32 %v912, 1.442695
        %v915 = vpow.pop %v914
        %v916 = vmul.f32 %v913, 1.442695
        %v917 = vpow.pop %v916
        %v918 = vadd.f32 %v915, 1.0
        %v919 = vadd.f32 %v917, 1.0
        %v920 = vrcp.pop %v918
        %v921 = vmul.f32 1.0, %v920
        %v922 = vrcp.pop %v919
        %v923 = vmul.f32 1.0, %v922
        %v924 = vmul.f32 %v921, %v801
        %v925 = vmul.f32 %v923, %v805
        %s926 = sld [smem:[#allocation4 + %s484]]
        %s927 = scvt.s32.f32 %s926
        %v928 = vstv %s927
        %v929 = vsub.f32 %v928, %v845
        %v931 = vlaneseq
        %v932 = vshrl.u32 %v931, 7
        %v933 = vsub.s32 0, %v932
        %v934 = vrot.slane %v929, %v933
        %v935 = vlaneseq
        %v936 = vshrl.u32 %v935, 7
        %v937 = vsub.s32 1, %v936
        %v938 = vrot.slane %v929, %v937
        %v941 = vmul.f32 %v924, %v934
        %v942 = vmul.f32 %v925, %v938
        %v945 = vcombine.low %v941, %v942
        %v947 = vunpack.c.l.s4 1966171168
        %v948 = vunpack.c.0.s8 %v947
        %v949 = vlaneseq
        %v950 = vshrl.u32 %v949, 7
        %v951 = vsub.s32 %v948, %v950
        %v952 = vrot.slane %v945, %v951
        %v954 = vunpack.c.l.s4 1966171168
        %v955 = vunpack.c.0.s8 %v954
        %v956 = vlaneseq
        %v957 = vshrl.u32 %v956, 7
        %v958 = vsub.s32 %v955, %v957
        %v959 = vrot.slane %v952, %v958
        %v961 = vadd.f32 %v845, %v959
        %s962 = scalar_lea.vmem %s419, 2 [#allocation9]
        %963 = vst.msk [vmem:[%s962] sm:$0x3] %vm849, %v961
        %v965 = vlaneseq
        %v966 = vshrl.u32 %v965, 7
        %v967 = vsub.s32 0, %v966
        %v968 = vrot.slane %v961, %v967
        %v969 = vlaneseq
        %v970 = vshrl.u32 %v969, 7
        %v971 = vsub.s32 1, %v970
        %v972 = vrot.slane %v961, %v971
        %v975 = vmul.f32 %v712, %v968
        %v976 = vmul.f32 %v712, %v972
        %v977 = vld [vmem:[%s545] sm:$0xff]
        %v978 = vld [vmem:[%s545 + $0x8] sm:$0xff]
        %v979 = vadd.f32 %v975, %v977
        %v980 = vadd.f32 %v976, %v978
        %v981 = vmax.f32 %v979, 0.0
        %v982 = vmax.f32 %v980, 0.0
        %v983 = vadd.f32 %v981, %v982
        %984 = vadd.xlane.f32.xlu0 %v983
        %v985 = vpop.xlane.xlu0 %984
        %v986 = vmul.f32 %v432, %v985
        %v987 = vrot.slane %v986, 4
        %v988 = vadd.f32 %v986, %v987
        %v989 = vrot.slane %v988, 2
        %v990 = vadd.f32 %v988, %v989
        %v991 = vrot.slane %v990, 1
        %v992 = vadd.f32 %v990, %v991
        %v993 = vadd.f32 %v992, %v433
        %v994 = vxor.u32 %v993, 2147483648
        %v995 = vmul.f32 %v994, 1.442695
        %v996 = vpow.pop %v995
        %v997 = vadd.f32 %v996, 1.0
        %v998 = vrcp.pop %v997
        %v999 = vmul.f32 1.0, %v998
        %s1000 = scalar_lea.vmem %s412, 2 [#allocation8]
        %1001 = vst [vmem:[%s1000] sm:$0x1] %v999
        %v1002 = vlaneseq
        %v1003 = vshrl.u32 %v1002, 7
        %v1004 = vsub.s32 0, %v1003
        %v1005 = vrot.slane %v999, %v1004
        %v1006 = vmul.f32 %v1005, %v445
        %1007 = vadd.xlane.f32.xlu0 %v1006
        %v1008 = vpop.xlane.xlu0 %1007
        %v1009 = vmul.f32 %v1008, %v434
        %v1010 = vmul.f32 %v1008, %v435
        %v1011 = vrot.slane %v1009, 4
        %v1012 = vadd.f32 %v1009, %v1011
        %v1013 = vrot.slane %v1012, 2
        %v1014 = vadd.f32 %v1012, %v1013
        %v1015 = vrot.slane %v1014, 1
        %v1016 = vadd.f32 %v1014, %v1015
        %v1017 = vrot.slane %v1010, 4
        %v1018 = vadd.f32 %v1010, %v1017
        %v1019 = vrot.slane %v1018, 2
        %v1020 = vadd.f32 %v1018, %v1019
        %v1021 = vrot.slane %v1020, 1
        %v1022 = vadd.f32 %v1020, %v1021
        %v1023 = vadd.f32 %v1016, %v776
        %v1024 = vadd.f32 %v1022, %v780
        %v1025 = vxor.u32 %v1023, 2147483648
        %v1026 = vxor.u32 %v1024, 2147483648
        %v1027 = vmul.f32 %v1025, 1.442695
        %v1028 = vpow.pop %v1027
        %v1029 = vmul.f32 %v1026, 1.442695
        %v1030 = vpow.pop %v1029
        %v1031 = vadd.f32 %v1028, 1.0
        %v1032 = vadd.f32 %v1030, 1.0
        %v1033 = vrcp.pop %v1031
        %v1034 = vmul.f32 1.0, %v1033
        %v1035 = vrcp.pop %v1032
        %v1036 = vmul.f32 1.0, %v1035
        %v1037 = vmul.f32 %v1034, %v801
        %v1038 = vmul.f32 %v1036, %v805
        %s1039 = sld [smem:[#allocation4 + %s516]]
        %s1040 = scvt.s32.f32 %s1039
        %v1041 = vstv %s1040
        %v1042 = vsub.f32 %v1041, %v961
        %v1044 = vlaneseq
        %v1045 = vshrl.u32 %v1044, 7
        %v1046 = vsub.s32 0, %v1045
        %v1047 = vrot.slane %v1042, %v1046
        %v1048 = vlaneseq
        %v1049 = vshrl.u32 %v1048, 7
        %v1050 = vsub.s32 1, %v1049
        %v1051 = vrot.slane %v1042, %v1050
        %v1054 = vmul.f32 %v1037, %v1047
        %v1055 = vmul.f32 %v1038, %v1051
        %v1058 = vcombine.low %v1054, %v1055
        %v1060 = vunpack.c.l.s4 1966171168
        %v1061 = vunpack.c.0.s8 %v1060
        %v1062 = vlaneseq
        %v1063 = vshrl.u32 %v1062, 7
        %v1064 = vsub.s32 %v1061, %v1063
        %v1065 = vrot.slane %v1058, %v1064
        %v1067 = vunpack.c.l.s4 1966171168
        %v1068 = vunpack.c.0.s8 %v1067
        %v1069 = vlaneseq
        %v1070 = vshrl.u32 %v1069, 7
        %v1071 = vsub.s32 %v1068, %v1070
        %v1072 = vrot.slane %v1065, %v1071
        %v1074 = vadd.f32 %v961, %v1072
        %s1075 = scalar_lea.vmem %s419, 4 [#allocation9]
        %1076 = vst.msk [vmem:[%s1075] sm:$0x3] %vm849, %v1074
        %v1078 = vlaneseq
        %v1079 = vshrl.u32 %v1078, 7
        %v1080 = vsub.s32 0, %v1079
        %v1081 = vrot.slane %v1074, %v1080
        %v1082 = vlaneseq
        %v1083 = vshrl.u32 %v1082, 7
        %v1084 = vsub.s32 1, %v1083
        %v1085 = vrot.slane %v1074, %v1084
        %v1088 = vmul.f32 %v712, %v1081
        %v1089 = vmul.f32 %v712, %v1085
        %v1090 = vld [vmem:[%s577] sm:$0xff]
        %v1091 = vld [vmem:[%s577 + $0x8] sm:$0xff]
        %v1092 = vadd.f32 %v1088, %v1090
        %v1093 = vadd.f32 %v1089, %v1091
        %v1094 = vmax.f32 %v1092, 0.0
        %v1095 = vmax.f32 %v1093, 0.0
        %v1096 = vadd.f32 %v1094, %v1095
        %1097 = vadd.xlane.f32.xlu0 %v1096
        %v1098 = vpop.xlane.xlu0 %1097
        %v1099 = vmul.f32 %v432, %v1098
        %v1100 = vrot.slane %v1099, 4
        %v1101 = vadd.f32 %v1099, %v1100
        %v1102 = vrot.slane %v1101, 2
        %v1103 = vadd.f32 %v1101, %v1102
        %v1104 = vrot.slane %v1103, 1
        %v1105 = vadd.f32 %v1103, %v1104
        %v1106 = vadd.f32 %v1105, %v433
        %v1107 = vxor.u32 %v1106, 2147483648
        %v1108 = vmul.f32 %v1107, 1.442695
        %v1109 = vpow.pop %v1108
        %v1110 = vadd.f32 %v1109, 1.0
        %v1111 = vrcp.pop %v1110
        %v1112 = vmul.f32 1.0, %v1111
        %s1113 = scalar_lea.vmem %s412, 3 [#allocation8]
        %1114 = vst [vmem:[%s1113] sm:$0x1] %v1112
        %v1115 = vlaneseq
        %v1116 = vshrl.u32 %v1115, 7
        %v1117 = vsub.s32 0, %v1116
        %v1118 = vrot.slane %v1112, %v1117
        %v1119 = vmul.f32 %v1118, %v445
        %1120 = vadd.xlane.f32.xlu0 %v1119
        %v1121 = vpop.xlane.xlu0 %1120
        %v1122 = vmul.f32 %v1121, %v434
        %v1123 = vmul.f32 %v1121, %v435
        %v1124 = vrot.slane %v1122, 4
        %v1125 = vadd.f32 %v1122, %v1124
        %v1126 = vrot.slane %v1125, 2
        %v1127 = vadd.f32 %v1125, %v1126
        %v1128 = vrot.slane %v1127, 1
        %v1129 = vadd.f32 %v1127, %v1128
        %v1130 = vrot.slane %v1123, 4
        %v1131 = vadd.f32 %v1123, %v1130
        %v1132 = vrot.slane %v1131, 2
        %v1133 = vadd.f32 %v1131, %v1132
        %v1134 = vrot.slane %v1133, 1
        %v1135 = vadd.f32 %v1133, %v1134
        %v1136 = vadd.f32 %v1129, %v776
        %v1137 = vadd.f32 %v1135, %v780
        %v1138 = vxor.u32 %v1136, 2147483648
        %v1139 = vxor.u32 %v1137, 2147483648
        %v1140 = vmul.f32 %v1138, 1.442695
        %v1141 = vpow.pop %v1140
        %v1142 = vmul.f32 %v1139, 1.442695
        %v1143 = vpow.pop %v1142
        %v1144 = vadd.f32 %v1141, 1.0
        %v1145 = vadd.f32 %v1143, 1.0
        %v1146 = vrcp.pop %v1144
        %v1147 = vmul.f32 1.0, %v1146
        %v1148 = vrcp.pop %v1145
        %v1149 = vmul.f32 1.0, %v1148
        %v1150 = vmul.f32 %v1147, %v801
        %v1151 = vmul.f32 %v1149, %v805
        %s1152 = sld [smem:[#allocation4 + %s548]]
        %s1153 = scvt.s32.f32 %s1152
        %v1154 = vstv %s1153
        %v1155 = vsub.f32 %v1154, %v1074
        %v1157 = vlaneseq
        %v1158 = vshrl.u32 %v1157, 7
        %v1159 = vsub.s32 0, %v1158
        %v1160 = vrot.slane %v1155, %v1159
        %v1161 = vlaneseq
        %v1162 = vshrl.u32 %v1161, 7
        %v1163 = vsub.s32 1, %v1162
        %v1164 = vrot.slane %v1155, %v1163
        %v1167 = vmul.f32 %v1150, %v1160
        %v1168 = vmul.f32 %v1151, %v1164
        %v1171 = vcombine.low %v1167, %v1168
        %v1173 = vunpack.c.l.s4 1966171168
        %v1174 = vunpack.c.0.s8 %v1173
        %v1175 = vlaneseq
        %v1176 = vshrl.u32 %v1175, 7
        %v1177 = vsub.s32 %v1174, %v1176
        %v1178 = vrot.slane %v1171, %v1177
        %v1180 = vunpack.c.l.s4 1966171168
        %v1181 = vunpack.c.0.s8 %v1180
        %v1182 = vlaneseq
        %v1183 = vshrl.u32 %v1182, 7
        %v1184 = vsub.s32 %v1181, %v1183
        %v1185 = vrot.slane %v1178, %v1184
        %v1187 = vadd.f32 %v1074, %v1185
        %s1188 = scalar_lea.vmem %s419, 6 [#allocation9]
        %1189 = vst.msk [vmem:[%s1188] sm:$0x3] %vm849, %v1187
        %v1191 = vlaneseq
        %v1192 = vshrl.u32 %v1191, 7
        %v1193 = vsub.s32 0, %v1192
        %v1194 = vrot.slane %v1187, %v1193
        %v1195 = vlaneseq
        %v1196 = vshrl.u32 %v1195, 7
        %v1197 = vsub.s32 1, %v1196
        %v1198 = vrot.slane %v1187, %v1197
        %v1201 = vmul.f32 %v712, %v1194
        %v1202 = vmul.f32 %v712, %v1198
        %v1203 = vld [vmem:[%s609] sm:$0xff]
        %v1204 = vld [vmem:[%s609 + $0x8] sm:$0xff]
        %v1205 = vadd.f32 %v1201, %v1203
        %v1206 = vadd.f32 %v1202, %v1204
        %v1207 = vmax.f32 %v1205, 0.0
        %v1208 = vmax.f32 %v1206, 0.0
        %v1209 = vadd.f32 %v1207, %v1208
        %1210 = vadd.xlane.f32.xlu0 %v1209
        %v1211 = vpop.xlane.xlu0 %1210
        %v1212 = vmul.f32 %v432, %v1211
        %v1213 = vrot.slane %v1212, 4
        %v1214 = vadd.f32 %v1212, %v1213
        %v1215 = vrot.slane %v1214, 2
        %v1216 = vadd.f32 %v1214, %v1215
        %v1217 = vrot.slane %v1216, 1
        %v1218 = vadd.f32 %v1216, %v1217
        %v1219 = vadd.f32 %v1218, %v433
        %v1220 = vxor.u32 %v1219, 2147483648
        %v1221 = vmul.f32 %v1220, 1.442695
        %v1222 = vpow.pop %v1221
        %v1223 = vadd.f32 %v1222, 1.0
        %v1224 = vrcp.pop %v1223
        %v1225 = vmul.f32 1.0, %v1224
        %s1226 = scalar_lea.vmem %s412, 4 [#allocation8]
        %1227 = vst [vmem:[%s1226] sm:$0x1] %v1225
        %v1228 = vlaneseq
        %v1229 = vshrl.u32 %v1228, 7
        %v1230 = vsub.s32 0, %v1229
        %v1231 = vrot.slane %v1225, %v1230
        %v1232 = vmul.f32 %v1231, %v445
        %1233 = vadd.xlane.f32.xlu0 %v1232
        %v1234 = vpop.xlane.xlu0 %1233
        %v1235 = vmul.f32 %v1234, %v434
        %v1236 = vmul.f32 %v1234, %v435
        %v1237 = vrot.slane %v1235, 4
        %v1238 = vadd.f32 %v1235, %v1237
        %v1239 = vrot.slane %v1238, 2
        %v1240 = vadd.f32 %v1238, %v1239
        %v1241 = vrot.slane %v1240, 1
        %v1242 = vadd.f32 %v1240, %v1241
        %v1243 = vrot.slane %v1236, 4
        %v1244 = vadd.f32 %v1236, %v1243
        %v1245 = vrot.slane %v1244, 2
        %v1246 = vadd.f32 %v1244, %v1245
        %v1247 = vrot.slane %v1246, 1
        %v1248 = vadd.f32 %v1246, %v1247
        %v1249 = vadd.f32 %v1242, %v776
        %v1250 = vadd.f32 %v1248, %v780
        %v1251 = vxor.u32 %v1249, 2147483648
        %v1252 = vxor.u32 %v1250, 2147483648
        %v1253 = vmul.f32 %v1251, 1.442695
        %v1254 = vpow.pop %v1253
        %v1255 = vmul.f32 %v1252, 1.442695
        %v1256 = vpow.pop %v1255
        %v1257 = vadd.f32 %v1254, 1.0
        %v1258 = vadd.f32 %v1256, 1.0
        %v1259 = vrcp.pop %v1257
        %v1260 = vmul.f32 1.0, %v1259
        %v1261 = vrcp.pop %v1258
        %v1262 = vmul.f32 1.0, %v1261
        %v1263 = vmul.f32 %v1260, %v801
        %v1264 = vmul.f32 %v1262, %v805
        %s1265 = sld [smem:[#allocation4 + %s580]]
        %s1266 = scvt.s32.f32 %s1265
        %v1267 = vstv %s1266
        %v1268 = vsub.f32 %v1267, %v1187
        %v1270 = vlaneseq
        %v1271 = vshrl.u32 %v1270, 7
        %v1272 = vsub.s32 0, %v1271
        %v1273 = vrot.slane %v1268, %v1272
        %v1274 = vlaneseq
        %v1275 = vshrl.u32 %v1274, 7
        %v1276 = vsub.s32 1, %v1275
        %v1277 = vrot.slane %v1268, %v1276
        %v1280 = vmul.f32 %v1263, %v1273
        %v1281 = vmul.f32 %v1264, %v1277
        %v1284 = vcombine.low %v1280, %v1281
        %v1286 = vunpack.c.l.s4 1966171168
        %v1287 = vunpack.c.0.s8 %v1286
        %v1288 = vlaneseq
        %v1289 = vshrl.u32 %v1288, 7
        %v1290 = vsub.s32 %v1287, %v1289
        %v1291 = vrot.slane %v1284, %v1290
        %v1293 = vunpack.c.l.s4 1966171168
        %v1294 = vunpack.c.0.s8 %v1293
        %v1295 = vlaneseq
        %v1296 = vshrl.u32 %v1295, 7
        %v1297 = vsub.s32 %v1294, %v1296
        %v1298 = vrot.slane %v1291, %v1297
        %v1300 = vadd.f32 %v1187, %v1298
        %s1301 = scalar_lea.vmem %s419, 8 [#allocation9]
        %1302 = vst.msk [vmem:[%s1301] sm:$0x3] %vm849, %v1300
        %v1304 = vlaneseq
        %v1305 = vshrl.u32 %v1304, 7
        %v1306 = vsub.s32 0, %v1305
        %v1307 = vrot.slane %v1300, %v1306
        %v1308 = vlaneseq
        %v1309 = vshrl.u32 %v1308, 7
        %v1310 = vsub.s32 1, %v1309
        %v1311 = vrot.slane %v1300, %v1310
        %v1314 = vmul.f32 %v712, %v1307
        %v1315 = vmul.f32 %v712, %v1311
        %v1316 = vld [vmem:[%s641] sm:$0xff]
        %v1317 = vld [vmem:[%s641 + $0x8] sm:$0xff]
        %v1318 = vadd.f32 %v1314, %v1316
        %v1319 = vadd.f32 %v1315, %v1317
        %v1320 = vmax.f32 %v1318, 0.0
        %v1321 = vmax.f32 %v1319, 0.0
        %v1322 = vadd.f32 %v1320, %v1321
        %1323 = vadd.xlane.f32.xlu0 %v1322
        %v1324 = vpop.xlane.xlu0 %1323
        %v1325 = vmul.f32 %v432, %v1324
        %v1326 = vrot.slane %v1325, 4
        %v1327 = vadd.f32 %v1325, %v1326
        %v1328 = vrot.slane %v1327, 2
        %v1329 = vadd.f32 %v1327, %v1328
        %v1330 = vrot.slane %v1329, 1
        %v1331 = vadd.f32 %v1329, %v1330
        %v1332 = vadd.f32 %v1331, %v433
        %v1333 = vxor.u32 %v1332, 2147483648
        %v1334 = vmul.f32 %v1333, 1.442695
        %v1335 = vpow.pop %v1334
        %v1336 = vadd.f32 %v1335, 1.0
        %v1337 = vrcp.pop %v1336
        %v1338 = vmul.f32 1.0, %v1337
        %s1339 = scalar_lea.vmem %s412, 5 [#allocation8]
        %1340 = vst [vmem:[%s1339] sm:$0x1] %v1338
        %v1341 = vlaneseq
        %v1342 = vshrl.u32 %v1341, 7
        %v1343 = vsub.s32 0, %v1342
        %v1344 = vrot.slane %v1338, %v1343
        %v1345 = vmul.f32 %v1344, %v445
        %1346 = vadd.xlane.f32.xlu0 %v1345
        %v1347 = vpop.xlane.xlu0 %1346
        %v1348 = vmul.f32 %v1347, %v434
        %v1349 = vmul.f32 %v1347, %v435
        %v1350 = vrot.slane %v1348, 4
        %v1351 = vadd.f32 %v1348, %v1350
        %v1352 = vrot.slane %v1351, 2
        %v1353 = vadd.f32 %v1351, %v1352
        %v1354 = vrot.slane %v1353, 1
        %v1355 = vadd.f32 %v1353, %v1354
        %v1356 = vrot.slane %v1349, 4
        %v1357 = vadd.f32 %v1349, %v1356
        %v1358 = vrot.slane %v1357, 2
        %v1359 = vadd.f32 %v1357, %v1358
        %v1360 = vrot.slane %v1359, 1
        %v1361 = vadd.f32 %v1359, %v1360
        %v1362 = vadd.f32 %v1355, %v776
        %v1363 = vadd.f32 %v1361, %v780
        %v1364 = vxor.u32 %v1362, 2147483648
        %v1365 = vxor.u32 %v1363, 2147483648
        %v1366 = vmul.f32 %v1364, 1.442695
        %v1367 = vpow.pop %v1366
        %v1368 = vmul.f32 %v1365, 1.442695
        %v1369 = vpow.pop %v1368
        %v1370 = vadd.f32 %v1367, 1.0
        %v1371 = vadd.f32 %v1369, 1.0
        %v1372 = vrcp.pop %v1370
        %v1373 = vmul.f32 1.0, %v1372
        %v1374 = vrcp.pop %v1371
        %v1375 = vmul.f32 1.0, %v1374
        %v1376 = vmul.f32 %v1373, %v801
        %v1377 = vmul.f32 %v1375, %v805
        %s1378 = sld [smem:[#allocation4 + %s612]]
        %s1379 = scvt.s32.f32 %s1378
        %v1380 = vstv %s1379
        %v1381 = vsub.f32 %v1380, %v1300
        %v1383 = vlaneseq
        %v1384 = vshrl.u32 %v1383, 7
        %v1385 = vsub.s32 0, %v1384
        %v1386 = vrot.slane %v1381, %v1385
        %v1387 = vlaneseq
        %v1388 = vshrl.u32 %v1387, 7
        %v1389 = vsub.s32 1, %v1388
        %v1390 = vrot.slane %v1381, %v1389
        %v1393 = vmul.f32 %v1376, %v1386
        %v1394 = vmul.f32 %v1377, %v1390
        %v1397 = vcombine.low %v1393, %v1394
        %v1399 = vunpack.c.l.s4 1966171168
        %v1400 = vunpack.c.0.s8 %v1399
        %v1401 = vlaneseq
        %v1402 = vshrl.u32 %v1401, 7
        %v1403 = vsub.s32 %v1400, %v1402
        %v1404 = vrot.slane %v1397, %v1403
        %v1406 = vunpack.c.l.s4 1966171168
        %v1407 = vunpack.c.0.s8 %v1406
        %v1408 = vlaneseq
        %v1409 = vshrl.u32 %v1408, 7
        %v1410 = vsub.s32 %v1407, %v1409
        %v1411 = vrot.slane %v1404, %v1410
        %v1413 = vadd.f32 %v1300, %v1411
        %s1414 = scalar_lea.vmem %s419, 10 [#allocation9]
        %1415 = vst.msk [vmem:[%s1414] sm:$0x3] %vm849, %v1413
        %v1417 = vlaneseq
        %v1418 = vshrl.u32 %v1417, 7
        %v1419 = vsub.s32 0, %v1418
        %v1420 = vrot.slane %v1413, %v1419
        %v1421 = vlaneseq
        %v1422 = vshrl.u32 %v1421, 7
        %v1423 = vsub.s32 1, %v1422
        %v1424 = vrot.slane %v1413, %v1423
        %v1427 = vmul.f32 %v712, %v1420
        %v1428 = vmul.f32 %v712, %v1424
        %v1429 = vld [vmem:[%s673] sm:$0xff]
        %v1430 = vld [vmem:[%s673 + $0x8] sm:$0xff]
        %v1431 = vadd.f32 %v1427, %v1429
        %v1432 = vadd.f32 %v1428, %v1430
        %v1433 = vmax.f32 %v1431, 0.0
        %v1434 = vmax.f32 %v1432, 0.0
        %v1435 = vadd.f32 %v1433, %v1434
        %1436 = vadd.xlane.f32.xlu0 %v1435
        %v1437 = vpop.xlane.xlu0 %1436
        %v1438 = vmul.f32 %v432, %v1437
        %v1439 = vrot.slane %v1438, 4
        %v1440 = vadd.f32 %v1438, %v1439
        %v1441 = vrot.slane %v1440, 2
        %v1442 = vadd.f32 %v1440, %v1441
        %v1443 = vrot.slane %v1442, 1
        %v1444 = vadd.f32 %v1442, %v1443
        %v1445 = vadd.f32 %v1444, %v433
        %v1446 = vxor.u32 %v1445, 2147483648
        %v1447 = vmul.f32 %v1446, 1.442695
        %v1448 = vpow.pop %v1447
        %v1449 = vadd.f32 %v1448, 1.0
        %v1450 = vrcp.pop %v1449
        %v1451 = vmul.f32 1.0, %v1450
        %s1452 = scalar_lea.vmem %s412, 6 [#allocation8]
        %1453 = vst [vmem:[%s1452] sm:$0x1] %v1451
        %v1454 = vlaneseq
        %v1455 = vshrl.u32 %v1454, 7
        %v1456 = vsub.s32 0, %v1455
        %v1457 = vrot.slane %v1451, %v1456
        %v1458 = vmul.f32 %v1457, %v445
        %1459 = vadd.xlane.f32.xlu0 %v1458
        %v1460 = vpop.xlane.xlu0 %1459
        %v1461 = vmul.f32 %v1460, %v434
        %v1462 = vmul.f32 %v1460, %v435
        %v1463 = vrot.slane %v1461, 4
        %v1464 = vadd.f32 %v1461, %v1463
        %v1465 = vrot.slane %v1464, 2
        %v1466 = vadd.f32 %v1464, %v1465
        %v1467 = vrot.slane %v1466, 1
        %v1468 = vadd.f32 %v1466, %v1467
        %v1469 = vrot.slane %v1462, 4
        %v1470 = vadd.f32 %v1462, %v1469
        %v1471 = vrot.slane %v1470, 2
        %v1472 = vadd.f32 %v1470, %v1471
        %v1473 = vrot.slane %v1472, 1
        %v1474 = vadd.f32 %v1472, %v1473
        %v1475 = vadd.f32 %v1468, %v776
        %v1476 = vadd.f32 %v1474, %v780
        %v1477 = vxor.u32 %v1475, 2147483648
        %v1478 = vxor.u32 %v1476, 2147483648
        %v1479 = vmul.f32 %v1477, 1.442695
        %v1480 = vpow.pop %v1479
        %v1481 = vmul.f32 %v1478, 1.442695
        %v1482 = vpow.pop %v1481
        %v1483 = vadd.f32 %v1480, 1.0
        %v1484 = vadd.f32 %v1482, 1.0
        %v1485 = vrcp.pop %v1483
        %v1486 = vmul.f32 1.0, %v1485
        %v1487 = vrcp.pop %v1484
        %v1488 = vmul.f32 1.0, %v1487
        %v1489 = vmul.f32 %v1486, %v801
        %v1490 = vmul.f32 %v1488, %v805
        %s1491 = sld [smem:[#allocation4 + %s644]]
        %s1492 = scvt.s32.f32 %s1491
        %v1493 = vstv %s1492
        %v1494 = vsub.f32 %v1493, %v1413
        %v1496 = vlaneseq
        %v1497 = vshrl.u32 %v1496, 7
        %v1498 = vsub.s32 0, %v1497
        %v1499 = vrot.slane %v1494, %v1498
        %v1500 = vlaneseq
        %v1501 = vshrl.u32 %v1500, 7
        %v1502 = vsub.s32 1, %v1501
        %v1503 = vrot.slane %v1494, %v1502
        %v1506 = vmul.f32 %v1489, %v1499
        %v1507 = vmul.f32 %v1490, %v1503
        %v1510 = vcombine.low %v1506, %v1507
        %v1512 = vunpack.c.l.s4 1966171168
        %v1513 = vunpack.c.0.s8 %v1512
        %v1514 = vlaneseq
        %v1515 = vshrl.u32 %v1514, 7
        %v1516 = vsub.s32 %v1513, %v1515
        %v1517 = vrot.slane %v1510, %v1516
        %v1519 = vunpack.c.l.s4 1966171168
        %v1520 = vunpack.c.0.s8 %v1519
        %v1521 = vlaneseq
        %v1522 = vshrl.u32 %v1521, 7
        %v1523 = vsub.s32 %v1520, %v1522
        %v1524 = vrot.slane %v1517, %v1523
        %v1526 = vadd.f32 %v1413, %v1524
        %s1527 = scalar_lea.vmem %s419, 12 [#allocation9]
        %1528 = vst.msk [vmem:[%s1527] sm:$0x3] %vm849, %v1526
        %v1530 = vlaneseq
        %v1531 = vshrl.u32 %v1530, 7
        %v1532 = vsub.s32 0, %v1531
        %v1533 = vrot.slane %v1526, %v1532
        %v1534 = vlaneseq
        %v1535 = vshrl.u32 %v1534, 7
        %v1536 = vsub.s32 1, %v1535
        %v1537 = vrot.slane %v1526, %v1536
        %v1540 = vmul.f32 %v712, %v1533
        %v1541 = vmul.f32 %v712, %v1537
        %v1542 = vld [vmem:[%s705] sm:$0xff]
        %v1543 = vld [vmem:[%s705 + $0x8] sm:$0xff]
        %v1544 = vadd.f32 %v1540, %v1542
        %v1545 = vadd.f32 %v1541, %v1543
        %v1546 = vmax.f32 %v1544, 0.0
        %v1547 = vmax.f32 %v1545, 0.0
        %v1548 = vadd.f32 %v1546, %v1547
        %1549 = vadd.xlane.f32.xlu0 %v1548
        %v1550 = vpop.xlane.xlu0 %1549
        %v1551 = vmul.f32 %v432, %v1550
        %v1552 = vrot.slane %v1551, 4
        %v1553 = vadd.f32 %v1551, %v1552
        %v1554 = vrot.slane %v1553, 2
        %v1555 = vadd.f32 %v1553, %v1554
        %v1556 = vrot.slane %v1555, 1
        %v1557 = vadd.f32 %v1555, %v1556
        %v1558 = vadd.f32 %v1557, %v433
        %v1559 = vxor.u32 %v1558, 2147483648
        %v1560 = vmul.f32 %v1559, 1.442695
        %v1561 = vpow.pop %v1560
        %v1562 = vadd.f32 %v1561, 1.0
        %v1563 = vrcp.pop %v1562
        %v1564 = vmul.f32 1.0, %v1563
        %s1565 = scalar_lea.vmem %s412, 7 [#allocation8]
        %1566 = vst [vmem:[%s1565] sm:$0x1] %v1564
        %v1567 = vlaneseq
        %v1568 = vshrl.u32 %v1567, 7
        %v1569 = vsub.s32 0, %v1568
        %v1570 = vrot.slane %v1564, %v1569
        %v1571 = vmul.f32 %v1570, %v445
        %1572 = vadd.xlane.f32.xlu0 %v1571
        %v1573 = vpop.xlane.xlu0 %1572
        %v1574 = vmul.f32 %v1573, %v434
        %v1575 = vmul.f32 %v1573, %v435
        %v1576 = vrot.slane %v1574, 4
        %v1577 = vadd.f32 %v1574, %v1576
        %v1578 = vrot.slane %v1577, 2
        %v1579 = vadd.f32 %v1577, %v1578
        %v1580 = vrot.slane %v1579, 1
        %v1581 = vadd.f32 %v1579, %v1580
        %v1582 = vrot.slane %v1575, 4
        %v1583 = vadd.f32 %v1575, %v1582
        %v1584 = vrot.slane %v1583, 2
        %v1585 = vadd.f32 %v1583, %v1584
        %v1586 = vrot.slane %v1585, 1
        %v1587 = vadd.f32 %v1585, %v1586
        %v1588 = vadd.f32 %v1581, %v776
        %v1589 = vadd.f32 %v1587, %v780
        %v1590 = vxor.u32 %v1588, 2147483648
        %v1591 = vxor.u32 %v1589, 2147483648
        %v1592 = vmul.f32 %v1590, 1.442695
        %v1593 = vpow.pop %v1592
        %v1594 = vmul.f32 %v1591, 1.442695
        %v1595 = vpow.pop %v1594
        %v1596 = vadd.f32 %v1593, 1.0
        %v1597 = vadd.f32 %v1595, 1.0
        %v1598 = vrcp.pop %v1596
        %v1599 = vmul.f32 1.0, %v1598
        %v1600 = vrcp.pop %v1597
        %v1601 = vmul.f32 1.0, %v1600
        %v1602 = vmul.f32 %v1599, %v801
        %v1603 = vmul.f32 %v1601, %v805
        %s1604 = sld [smem:[#allocation4 + %s676]]
        %s1605 = scvt.s32.f32 %s1604
        %v1606 = vstv %s1605
        %v1607 = vsub.f32 %v1606, %v1526
        %v1609 = vlaneseq
        %v1610 = vshrl.u32 %v1609, 7
        %v1611 = vsub.s32 0, %v1610
        %v1612 = vrot.slane %v1607, %v1611
        %v1613 = vlaneseq
        %v1614 = vshrl.u32 %v1613, 7
        %v1615 = vsub.s32 1, %v1614
        %v1616 = vrot.slane %v1607, %v1615
        %v1619 = vmul.f32 %v1602, %v1612
        %v1620 = vmul.f32 %v1603, %v1616
        %v1623 = vcombine.low %v1619, %v1620
        %v1625 = vunpack.c.l.s4 1966171168
        %v1626 = vunpack.c.0.s8 %v1625
        %v1627 = vlaneseq
        %v1628 = vshrl.u32 %v1627, 7
        %v1629 = vsub.s32 %v1626, %v1628
        %v1630 = vrot.slane %v1623, %v1629
        %v1632 = vunpack.c.l.s4 1966171168
        %v1633 = vunpack.c.0.s8 %v1632
        %v1634 = vlaneseq
        %v1635 = vshrl.u32 %v1634, 7
        %v1636 = vsub.s32 %v1633, %v1635
        %v1637 = vrot.slane %v1630, %v1636
        %v1639 = vadd.f32 %v1526, %v1637
        %s1640 = scalar_lea.vmem %s419, 14 [#allocation9]
        %1641 = vst.msk [vmem:[%s1640] sm:$0x3] %vm849, %v1639
        %s1642 = sand.u32 %s248, 1
        %s1643 = scalar_lea.sflag [#allocation7], %s1642
        %s1644 = sand.u32 %s248, 1
        %s1645 = smul.addr %s1644, 8
        %s1646 = scalar_lea.vmem [#allocation8], %s1645
        %s1647 = sand.u32 %s274, 1
        %s1648 = scalar_lea.sflag [#allocation10], %s1647
        %s1649 = sand.u32 %s274, 1
        %s1650 = smul.addr %s1649, 16
        %s1651 = scalar_lea.vmem [#allocation9], %s1650
        // Predicated region
        $region61: #{tpu_custom_call.1} parent=55 // pred_check
          %p1652 = pneg %p258
        $region62: #{tpu_custom_call.1} parent=55 // pred_check_branch
          %1654 = sbr.rel (%p1652) target = $region64
        $region63: #{tpu_custom_call.1} parent=55 // pred_region
          %s1656 = ssub.s32 128, 128
          %1657 = vsyncadd %s1643, %s1656
          %s1658 = smul.addr %s36, 8
          %s1659 = smul.addr %s1658, 16
          %s1660 = scalar_lea.hbm %s10, %s1659
          %s1661 = sshll.u32 %s1646, 4
          %s1662 = int_to_ptr.vmem [resolvable:$true] %s1661
          %1667 = dma.vmem_to_hbm [thread:$0]  %s1662, 128, %s1660, %s1643, 16, 16, 1
        $region64: #{tpu_custom_call.1} parent=55 // pred_fallthru
          _
        // Predicated region
        $region65: #{tpu_custom_call.1} parent=55 // pred_check
          %p1668 = pneg %p284
        $region66: #{tpu_custom_call.1} parent=55 // pred_check_branch
          %1670 = sbr.rel (%p1668) target = $region68
        $region67: #{tpu_custom_call.1} parent=55 // pred_region
          %s1672 = ssub.s32 256, 256
          %1673 = vsyncadd %s1648, %s1672
          %s1674 = smul.addr %s36, 16
          %s1675 = smul.addr %s1674, 16
          %s1676 = scalar_lea.hbm %s11, %s1675
          %s1677 = sshll.u32 %s1651, 4
          %s1678 = int_to_ptr.vmem [resolvable:$true] %s1677
          %1683 = dma.vmem_to_hbm [thread:$0]  %s1678, 256, %s1676, %s1648, 32, 32, 2
        $region68: #{tpu_custom_call.1} parent=55 // pred_fallthru
          _
      $region56: #{tpu_custom_call.1} parent=5 // pred_fallthru
        _
      %p1684 = scmp.le.s32.totalorder 2, %s31
      // Predicated region
      $region69: #{tpu_custom_call.1} parent=5 // pred_check
        %p1685 = pneg %p1684
      $region70: #{tpu_custom_call.1} parent=5 // pred_check_branch
        %1687 = sbr.rel (%p1685) target = $region72
      $region71: #{tpu_custom_call.1} parent=5 // pred_region
        %s1688 = ssub.s32 %s31, 2
        // Predicated region
        $region73: #{tpu_custom_call.1} parent=71 // pred_check
          %p1689 = pneg %p264
        $region74: #{tpu_custom_call.1} parent=71 // pred_check_branch
          %1691 = sbr.rel (%p1689) target = $region76
        $region75: #{tpu_custom_call.1} parent=71 // pred_region
          %s1692 = sand.u32 %s249, 1
          %s1693 = scalar_lea.sflag [#allocation7], %s1692
          %s1694 = sand.u32 %s249, 1
          %s1695 = smul.addr %s1694, 8
          %s1696 = scalar_lea.vmem [#allocation8], %s1695
          %1697 = dma.done %s1693, 128
        $region76: #{tpu_custom_call.1} parent=71 // pred_fallthru
          _
        // Predicated region
        $region77: #{tpu_custom_call.1} parent=71 // pred_check
          %p1698 = pneg %p290
        $region78: #{tpu_custom_call.1} parent=71 // pred_check_branch
          %1700 = sbr.rel (%p1698) target = $region80
        $region79: #{tpu_custom_call.1} parent=71 // pred_region
          %s1701 = sand.u32 %s275, 1
          %s1702 = scalar_lea.sflag [#allocation10], %s1701
          %s1703 = sand.u32 %s275, 1
          %s1704 = smul.addr %s1703, 16
          %s1705 = scalar_lea.vmem [#allocation9], %s1704
          %1706 = dma.done %s1702, 256
        $region80: #{tpu_custom_call.1} parent=71 // pred_fallthru
          _
      $region72: #{tpu_custom_call.1} parent=5 // pred_fallthru
        _
    $region6: #{tpu_custom_call.1} parent=1 // loop_footer
      %s35 = sadd.s32 1, %s31
    $region7: #{tpu_custom_call.1} parent=1 // loop_footer_branch
      %30 = sbr.rel target = $region3
    $region8: #{tpu_custom_call.1} parent=1 // loop_exit
      _
    %1707 = vsyncpa [#allocation6], 1
    %s1708 = scalar_lea.sflag [#allocation6], 1
    %1709 = vsyncpa %s1708, 1
    %1710 = vsyncpa [#allocation7], 1
    %s1711 = scalar_lea.sflag [#allocation7], 1
    %1712 = vsyncpa %s1711, 1
    %1713 = vsyncpa [#allocation10], 1
    %s1714 = scalar_lea.sflag [#allocation10], 1
    %1715 = vsyncpa %s1714, 1

</llo_original>
